<compile_context>
chip_gen: v7x
topology: tpu7x:2x2x1
jax: 0.10.0
libtpu: 0.0.40
codegen_flags: <defaults>
</compile_context>

<pallas_src>
import math

import jax
import jax.numpy as jnp
import numpy as np
from jax import lax
from jax.experimental import pallas as pl
from jax.experimental.pallas import tpu as pltpu

# ----------------------- small config (ModelArgs-consistent) -----------------------
B = 2
S = 8
DIM = 64
N_HEAD = 4
N_LOCAL_HEADS = 2
HEAD_DIM = DIM // N_HEAD                  # 16
HALF = HEAD_DIM // 2                      # 8
INTERMEDIATE = 128
ROPE_BASE = 10000.0
EPS = 1e-5
REP = N_HEAD // N_LOCAL_HEADS             # GQA repeat factor
KV_SIZE = N_LOCAL_HEADS * HEAD_DIM        # 32
QKV_OUT = (N_HEAD + 2 * N_LOCAL_HEADS) * HEAD_DIM   # 128
QKV_EXT = QKV_OUT + DIM + KV_SIZE         # 224: [q | k | v | q_rot | k_rot]
SCALE = 1.0 / math.sqrt(HEAD_DIM)         # sdpa default scale
NEG_INF = -1e30


# ----------------------------------- helpers (in-kernel) ---------------------------
def _rmsnorm(x, g):
    ms = jnp.mean(x * x, axis=-1, keepdims=True)
    return x * lax.rsqrt(ms + EPS) * g


# ----------------------------------- fused kernel ----------------------------------
def transformer_block_kernel(x_ref, ln1_ref, ln2_ref, wqkv_ref, wo_ref,
                             w13_ref, w2_ref, cos_ref, sin_ref, mask_ref,
                             o_ref):
    x = x_ref[...]                                            # (BS, D)

    # ---- attention branch: RMSNorm + fused QKV matmul (rotate_half folded in) ----
    n1 = _rmsnorm(x, ln1_ref[...])
    # NOTE: at real Llama sizes cast matmul inputs to bf16 (f32 accumulate),
    # K/N-tile weight BlockSpecs (256-wide on v6e/v7x), single-buffer them
    # (pipeline_mode=pl.Buffered(1)), and set vmem_limit_bytes for v7x.
    qkv = jnp.dot(n1, wqkv_ref[...], preferred_element_type=jnp.float32)  # (BS, QKV_EXT)
    q = qkv[:, :DIM]                                          # (BS, DIM)
    k = qkv[:, DIM:DIM + KV_SIZE]                             # (BS, KV_SIZE)
    v = qkv[:, DIM + KV_SIZE:QKV_OUT]                         # (BS, KV_SIZE)
    q_rot = qkv[:, QKV_OUT:QKV_OUT + DIM]                     # rotate_half(q), via weights
    k_rot = qkv[:, QKV_OUT + DIM:]                            # rotate_half(k), via weights

    # ---- RoPE: pure FMAs (cos/sin head-tiled + batch-tiled in the wrapper) ----
    cos = cos_ref[...]                                        # (BS, DIM)
    sin = sin_ref[...]                                        # (BS, DIM)
    q = q * cos + q_rot * sin
    k = k * cos[:, :KV_SIZE] + k_rot * sin[:, :KV_SIZE]

    mask = mask_ref[...]                                      # (BS, BS) block-diag causal

    # ---- GQA attention: per query head, whole batch in one matmul pair ----
    y_parts = []
    for h in range(N_HEAD):                                   # static unrolled (4)
        g = h // REP                                          # KV head for this q head
        q_h = q[:, h * HEAD_DIM:(h + 1) * HEAD_DIM]           # (BS, hd)
        k_g = k[:, g * HEAD_DIM:(g + 1) * HEAD_DIM]           # (BS, hd)
        v_g = v[:, g * HEAD_DIM:(g + 1) * HEAD_DIM]           # (BS, hd)
        s = lax.dot_general(q_h, k_g, (((1,), (1,)), ((), ())),
                            preferred_element_type=jnp.float32) * SCALE + mask
        m = jnp.max(s, axis=-1, keepdims=True)
        e = jnp.exp(s - m)
        p = e / jnp.sum(e, axis=-1, keepdims=True)            # exact softmax
        y_parts.append(jnp.dot(p, v_g, preferred_element_type=jnp.float32))
    y = jnp.concatenate(y_parts, axis=-1)                     # (BS, DIM), VMEM only

    # ---- output projection + residual ----
    h_res = x + jnp.dot(y, wo_ref[...], preferred_element_type=jnp.float32)

    # ---- post-attention RMSNorm + SwiGLU FFN + residual ----
    n2 = _rmsnorm(h_res, ln2_ref[...])
    u = jnp.dot(n2, w13_ref[...], preferred_element_type=jnp.float32)     # (BS, 2I)
    a = u[:, :INTERMEDIATE]
    b = u[:, INTERMEDIATE:]
    act = a * jax.nn.sigmoid(a) * b                           # silu(a) * b
    o_ref[...] = h_res + jnp.dot(act, w2_ref[...], preferred_element_type=jnp.float32)


# ----------------------------------- wrapper ----------------------------------------
def rope_cos_sin(input_pos):
    # LlamaRotaryEmbedding, rope_type='default' (attention_scaling = 1.0)
    inv_freq = 1.0 / (ROPE_BASE ** (jnp.arange(0, HEAD_DIM, 2, dtype=jnp.float32) / HEAD_DIM))
    freqs = input_pos.astype(jnp.float32)[:, None] * inv_freq[None, :]   # (S, hd/2)
    emb = jnp.concatenate([freqs, freqs], axis=-1)                       # (S, hd)
    return jnp.cos(emb), jnp.sin(emb)


def rope_tables_tiled(input_pos, batch):
    """cos/sin tiled over heads (lanes) and batch (rows): (B*S, DIM)."""
    cos, sin = rope_cos_sin(input_pos)                                   # (S, hd)
    return jnp.tile(cos, (batch, N_HEAD)), jnp.tile(sin, (batch, N_HEAD))


def _rotate_half_cols(w, n_heads):
    """Column-permute + sign-fold a (D, n_heads*hd) weight so x @ w_rot == rotate_half(x @ w)."""
    blocks = []
    for h in range(n_heads):
        blk = w[:, h * HEAD_DIM:(h + 1) * HEAD_DIM]
        blocks.append(jnp.concatenate([-blk[:, HALF:], blk[:, :HALF]], axis=1))
    return jnp.concatenate(blocks, axis=1)


def transformer_block(x, input_pos, mask, params):
    """Pallas implementation of TransformerBlock.forward (single fused kernel, no grid).

    x: (B, S, DIM) f32 ; input_pos: (S,) i32 ; mask: (S, S) f32 additive mask
    (0.0 = attend, -1e30 = masked), equivalent to a bool mask fed to SDPA.
    """
    Bx, Sx, D = x.shape
    BS = Bx * Sx
    x2d = x.reshape(BS, D)

    cos_t, sin_t = rope_tables_tiled(input_pos, Bx)                      # (BS, DIM)

    # Block-diagonal additive mask over the flattened token axis: tokens of
    # different batch entries never attend to each other.
    neg = jnp.full((Sx, Sx), NEG_INF, jnp.float32)
    mask_bd = jnp.concatenate(
        [jnp.concatenate([mask if bj == bi else neg for bj in range(Bx)], axis=1)
         for bi in range(Bx)], axis=0)                                   # (BS, BS)

    # Fold the rotate_half permutation (with its sign) into extra wqkv columns.
    wqkv = params["wqkv"]
    wq_rot = _rotate_half_cols(wqkv[:, :DIM], N_HEAD)
    wk_rot = _rotate_half_cols(wqkv[:, DIM:DIM + KV_SIZE], N_LOCAL_HEADS)
    wqkv_ext = jnp.concatenate([wqkv, wq_rot, wk_rot], axis=1)           # (D, QKV_EXT)

    # Advisory cost estimate for XLA's scheduler.
    mm_flops = 2 * BS * (D * QKV_EXT + D * D + D * 2 * INTERMEDIATE + INTERMEDIATE * D)
    attn_flops = N_HEAD * 2 * (2 * BS * HEAD_DIM * BS)
    bytes_accessed = 4 * (BS * D * 2 + 2 * D + D * QKV_EXT + D * D
                          + D * 2 * INTERMEDIATE + INTERMEDIATE * D
                          + 2 * BS * D + BS * BS)
    cost = pl.CostEstimate(
        flops=mm_flops + attn_flops,
        transcendentals=N_HEAD * BS * BS + 2 * BS + BS * INTERMEDIATE,
        bytes_accessed=bytes_accessed)

    vmem = pl.BlockSpec(memory_space=pltpu.MemorySpace.VMEM)
    out2d = pl.pallas_call(
        transformer_block_kernel,
        out_shape=jax.ShapeDtypeStruct((BS, D), jnp.float32),
        in_specs=[vmem] * 10,
        out_specs=vmem,
        cost_estimate=cost,
    )(x2d, params["ln1"], params["ln2"], wqkv_ext, params["wo"],
      params["w13"], params["w2"], cos_t, sin_t, mask_bd)
    return out2d.reshape(Bx, Sx, D)


# ----------------------------------- pure-JAX reference ----------------------------
def reference_block(x, input_pos, mask, params):
    hp = lax.Precision.HIGHEST

    def rmsnorm(t, g):
        ms = jnp.mean(t * t, axis=-1, keepdims=True)
        return t * lax.rsqrt(ms + EPS) * g

    cos, sin = rope_cos_sin(input_pos)

    def rot_half(t):
        half = t.shape[-1] // 2
        return jnp.concatenate([-t[..., half:], t[..., :half]], axis=-1)

    n1 = rmsnorm(x, params["ln1"][0])
    qkv = jnp.matmul(n1, params["wqkv"], precision=hp)
    q = qkv[..., :DIM].reshape(B, S, N_HEAD, HEAD_DIM).transpose(0, 2, 1, 3)
    k = qkv[..., DIM:DIM + KV_SIZE].reshape(B, S, N_LOCAL_HEADS, HEAD_DIM).transpose(0, 2, 1, 3)
    v = qkv[..., DIM + KV_SIZE:].reshape(B, S, N_LOCAL_HEADS, HEAD_DIM).transpose(0, 2, 1, 3)
    c = cos[None, None]
    s_ = sin[None, None]
    q = q * c + rot_half(q) * s_
    k = k * c + rot_half(k) * s_
    k = jnp.repeat(k, REP, axis=1)
    v = jnp.repeat(v, REP, axis=1)
    scores = jnp.einsum("bhqd,bhkd->bhqk", q, k, precision=hp) * SCALE + mask[None, None]
    p = jax.nn.softmax(scores, axis=-1)
    y = jnp.einsum("bhqk,bhkd->bhqd", p, v, precision=hp)
    y = y.transpose(0, 2, 1, 3).reshape(B, S, DIM)
    h = x + jnp.matmul(y, params["wo"], precision=hp)
    n2 = rmsnorm(h, params["ln2"][0])
    u = jnp.matmul(n2, params["w13"], precision=hp)
    a, b = u[..., :INTERMEDIATE], u[..., INTERMEDIATE:]
    return h + jnp.matmul(jax.nn.silu(a) * b, params["w2"], precision=hp)


# ----------------------------------- main -------------------------------------------
if __name__ == "__main__":
    key = jax.random.PRNGKey(0)
    kx, k1, k2, k3, k4 = jax.random.split(key, 5)

    params = {
        # RMSNorm weights initialize to ones in the PyTorch module
        "ln1": jnp.ones((1, DIM), jnp.float32),
        "ln2": jnp.ones((1, DIM), jnp.float32),
        # linear weights stored [in, out]
        "wqkv": jax.random.normal(k1, (DIM, QKV_OUT), jnp.float32) * 0.02,
        "wo": jax.random.normal(k2, (DIM, DIM), jnp.float32) * 0.02,
        "w13": jax.random.normal(k3, (DIM, 2 * INTERMEDIATE), jnp.float32) * 0.02,
        "w2": jax.random.normal(k4, (INTERMEDIATE, DIM), jnp.float32) * 0.02,
    }

    x = jax.random.normal(kx, (B, S, DIM), jnp.float32)
    input_pos = jnp.arange(S, dtype=jnp.int32)
    causal = jnp.tril(jnp.ones((S, S), bool))
    mask = jnp.where(causal, 0.0, NEG_INF).astype(jnp.float32)   # additive SDPA mask

    out = transformer_block(x, input_pos, mask, params)
    out = jax.block_until_ready(out)

    ref = jax.block_until_ready(reference_block(x, input_pos, mask, params))
    assert out.shape == (B, S, DIM)
    np.testing.assert_allclose(np.asarray(out), np.asarray(ref), rtol=2e-2, atol=2e-2)

    print("KERNEL_OK")
</pallas_src>

<mosaic_0001>
module attributes {stable_mosaic.version = 11 : i64} {
  func.func @transformer_block_kernel(%arg0: memref<16x64xf32, #tpu.memory_space<vmem>>, %arg1: memref<1x64xf32, #tpu.memory_space<vmem>>, %arg2: memref<1x64xf32, #tpu.memory_space<vmem>>, %arg3: memref<64x224xf32, #tpu.memory_space<vmem>>, %arg4: memref<64x64xf32, #tpu.memory_space<vmem>>, %arg5: memref<64x256xf32, #tpu.memory_space<vmem>>, %arg6: memref<128x64xf32, #tpu.memory_space<vmem>>, %arg7: memref<16x64xf32, #tpu.memory_space<vmem>>, %arg8: memref<16x64xf32, #tpu.memory_space<vmem>>, %arg9: memref<16x16xf32, #tpu.memory_space<vmem>>, %arg10: memref<16x64xf32, #tpu.memory_space<vmem>>) attributes {dimension_semantics = [], scalar_prefetch = 0 : i64, scratch_operands = 0 : i64, tpu.core_type = #tpu.core_type<tc>} {
    %c0 = arith.constant 0 : index
    %c0_0 = arith.constant 0 : index
    %0 = vector.load %arg0[%c0, %c0_0] : memref<16x64xf32, #tpu.memory_space<vmem>>, vector<16x64xf32>
    %c0_1 = arith.constant 0 : index
    %c0_2 = arith.constant 0 : index
    %1 = vector.load %arg1[%c0_1, %c0_2] : memref<1x64xf32, #tpu.memory_space<vmem>>, vector<1x64xf32>
    %2 = arith.mulf %0, %0 : vector<16x64xf32>
    %cst = arith.constant dense<0.000000e+00> : vector<16xf32>
    %3 = vector.multi_reduction <add>, %2, %cst [1] : vector<16x64xf32> to vector<16xf32>
    %4 = vector.shape_cast %3 : vector<16xf32> to vector<16x1xf32>
    %cst_3 = arith.constant 6.400000e+01 : f32
    %5 = vector.broadcast %cst_3 : f32 to vector<16x1xf32>
    %6 = arith.divf %4, %5 : vector<16x1xf32>
    %cst_4 = arith.constant 9.99999974E-6 : f32
    %7 = vector.broadcast %cst_4 : f32 to vector<16x1xf32>
    %8 = arith.addf %6, %7 : vector<16x1xf32>
    %9 = math.rsqrt %8 : vector<16x1xf32>
    %10 = vector.broadcast %9 : vector<16x1xf32> to vector<16x64xf32>
    %11 = arith.mulf %0, %10 : vector<16x64xf32>
    %12 = vector.broadcast %1 : vector<1x64xf32> to vector<16x64xf32>
    %13 = arith.mulf %11, %12 : vector<16x64xf32>
    %c0_5 = arith.constant 0 : index
    %c0_6 = arith.constant 0 : index
    %14 = vector.load %arg3[%c0_5, %c0_6] : memref<64x224xf32, #tpu.memory_space<vmem>>, vector<64x224xf32>
    %cst_7 = arith.constant dense<0.000000e+00> : vector<16x224xf32>
    %15 = tpu.matmul %13, %14, %cst_7 {dimension_numbers = #tpu.dot_dimension_numbers<[1], [0], [0], [1], [0, 0, 1, 1], [], []>} : vector<16x64xf32>, vector<64x224xf32>, vector<16x224xf32> -> vector<16x224xf32>
    %16 = vector.extract_strided_slice %15 {offsets = [0, 0], sizes = [16, 64], strides = [1, 1]} : vector<16x224xf32> to vector<16x64xf32>
    %17 = vector.extract_strided_slice %15 {offsets = [0, 64], sizes = [16, 32], strides = [1, 1]} : vector<16x224xf32> to vector<16x32xf32>
    %18 = vector.extract_strided_slice %15 {offsets = [0, 96], sizes = [16, 32], strides = [1, 1]} : vector<16x224xf32> to vector<16x32xf32>
    %19 = vector.extract_strided_slice %15 {offsets = [0, 128], sizes = [16, 64], strides = [1, 1]} : vector<16x224xf32> to vector<16x64xf32>
    %20 = vector.extract_strided_slice %15 {offsets = [0, 192], sizes = [16, 32], strides = [1, 1]} : vector<16x224xf32> to vector<16x32xf32>
    %c0_8 = arith.constant 0 : index
    %c0_9 = arith.constant 0 : index
    %21 = vector.load %arg7[%c0_8, %c0_9] : memref<16x64xf32, #tpu.memory_space<vmem>>, vector<16x64xf32>
    %c0_10 = arith.constant 0 : index
    %c0_11 = arith.constant 0 : index
    %22 = vector.load %arg8[%c0_10, %c0_11] : memref<16x64xf32, #tpu.memory_space<vmem>>, vector<16x64xf32>
    %23 = arith.mulf %16, %21 : vector<16x64xf32>
    %24 = arith.mulf %19, %22 : vector<16x64xf32>
    %25 = arith.addf %23, %24 : vector<16x64xf32>
    %26 = vector.extract_strided_slice %21 {offsets = [0, 0], sizes = [16, 32], strides = [1, 1]} : vector<16x64xf32> to vector<16x32xf32>
    %27 = arith.mulf %17, %26 : vector<16x32xf32>
    %28 = vector.extract_strided_slice %22 {offsets = [0, 0], sizes = [16, 32], strides = [1, 1]} : vector<16x64xf32> to vector<16x32xf32>
    %29 = arith.mulf %20, %28 : vector<16x32xf32>
    %30 = arith.addf %27, %29 : vector<16x32xf32>
    %c0_12 = arith.constant 0 : index
    %c0_13 = arith.constant 0 : index
    %31 = vector.load %arg9[%c0_12, %c0_13] : memref<16x16xf32, #tpu.memory_space<vmem>>, vector<16x16xf32>
    %32 = vector.extract_strided_slice %25 {offsets = [0, 0], sizes = [16, 16], strides = [1, 1]} : vector<16x64xf32> to vector<16x16xf32>
    %33 = vector.extract_strided_slice %30 {offsets = [0, 0], sizes = [16, 16], strides = [1, 1]} : vector<16x32xf32> to vector<16x16xf32>
    %34 = vector.extract_strided_slice %18 {offsets = [0, 0], sizes = [16, 16], strides = [1, 1]} : vector<16x32xf32> to vector<16x16xf32>
    %cst_14 = arith.constant dense<0.000000e+00> : vector<16x16xf32>
    %35 = tpu.matmul %32, %33, %cst_14 {dimension_numbers = #tpu.dot_dimension_numbers<[1], [1], [0], [0], [0, 0, 1, 0], [], []>} : vector<16x16xf32>, vector<16x16xf32>, vector<16x16xf32> -> vector<16x16xf32>
    %cst_15 = arith.constant 2.500000e-01 : f32
    %36 = vector.broadcast %cst_15 : f32 to vector<16x16xf32>
    %37 = arith.mulf %35, %36 : vector<16x16xf32>
    %38 = arith.addf %37, %31 : vector<16x16xf32>
    %cst_16 = arith.constant dense<0xFF800000> : vector<16xf32>
    %39 = vector.multi_reduction <maximumf>, %38, %cst_16 [1] : vector<16x16xf32> to vector<16xf32>
    %40 = vector.shape_cast %39 : vector<16xf32> to vector<16x1xf32>
    %41 = vector.broadcast %40 : vector<16x1xf32> to vector<16x16xf32>
    %42 = arith.subf %38, %41 : vector<16x16xf32>
    %43 = math.exp %42 : vector<16x16xf32>
    %cst_17 = arith.constant dense<0.000000e+00> : vector<16xf32>
    %44 = vector.multi_reduction <add>, %43, %cst_17 [1] : vector<16x16xf32> to vector<16xf32>
    %45 = vector.shape_cast %44 : vector<16xf32> to vector<16x1xf32>
    %46 = vector.broadcast %45 : vector<16x1xf32> to vector<16x16xf32>
    %47 = arith.divf %43, %46 : vector<16x16xf32>
    %cst_18 = arith.constant dense<0.000000e+00> : vector<16x16xf32>
    %48 = tpu.matmul %47, %34, %cst_18 {dimension_numbers = #tpu.dot_dimension_numbers<[1], [0], [0], [1], [0, 0, 1, 1], [], []>} : vector<16x16xf32>, vector<16x16xf32>, vector<16x16xf32> -> vector<16x16xf32>
    %49 = vector.extract_strided_slice %25 {offsets = [0, 16], sizes = [16, 16], strides = [1, 1]} : vector<16x64xf32> to vector<16x16xf32>
    %50 = vector.extract_strided_slice %30 {offsets = [0, 0], sizes = [16, 16], strides = [1, 1]} : vector<16x32xf32> to vector<16x16xf32>
    %51 = vector.extract_strided_slice %18 {offsets = [0, 0], sizes = [16, 16], strides = [1, 1]} : vector<16x32xf32> to vector<16x16xf32>
    %cst_19 = arith.constant dense<0.000000e+00> : vector<16x16xf32>
    %52 = tpu.matmul %49, %50, %cst_19 {dimension_numbers = #tpu.dot_dimension_numbers<[1], [1], [0], [0], [0, 0, 1, 0], [], []>} : vector<16x16xf32>, vector<16x16xf32>, vector<16x16xf32> -> vector<16x16xf32>
    %cst_20 = arith.constant 2.500000e-01 : f32
    %53 = vector.broadcast %cst_20 : f32 to vector<16x16xf32>
    %54 = arith.mulf %52, %53 : vector<16x16xf32>
    %55 = arith.addf %54, %31 : vector<16x16xf32>
    %cst_21 = arith.constant dense<0xFF800000> : vector<16xf32>
    %56 = vector.multi_reduction <maximumf>, %55, %cst_21 [1] : vector<16x16xf32> to vector<16xf32>
    %57 = vector.shape_cast %56 : vector<16xf32> to vector<16x1xf32>
    %58 = vector.broadcast %57 : vector<16x1xf32> to vector<16x16xf32>
    %59 = arith.subf %55, %58 : vector<16x16xf32>
    %60 = math.exp %59 : vector<16x16xf32>
    %cst_22 = arith.constant dense<0.000000e+00> : vector<16xf32>
    %61 = vector.multi_reduction <add>, %60, %cst_22 [1] : vector<16x16xf32> to vector<16xf32>
    %62 = vector.shape_cast %61 : vector<16xf32> to vector<16x1xf32>
    %63 = vector.broadcast %62 : vector<16x1xf32> to vector<16x16xf32>
    %64 = arith.divf %60, %63 : vector<16x16xf32>
    %cst_23 = arith.constant dense<0.000000e+00> : vector<16x16xf32>
    %65 = tpu.matmul %64, %51, %cst_23 {dimension_numbers = #tpu.dot_dimension_numbers<[1], [0], [0], [1], [0, 0, 1, 1], [], []>} : vector<16x16xf32>, vector<16x16xf32>, vector<16x16xf32> -> vector<16x16xf32>
    %66 = vector.extract_strided_slice %25 {offsets = [0, 32], sizes = [16, 16], strides = [1, 1]} : vector<16x64xf32> to vector<16x16xf32>
    %67 = vector.extract_strided_slice %30 {offsets = [0, 16], sizes = [16, 16], strides = [1, 1]} : vector<16x32xf32> to vector<16x16xf32>
    %68 = vector.extract_strided_slice %18 {offsets = [0, 16], sizes = [16, 16], strides = [1, 1]} : vector<16x32xf32> to vector<16x16xf32>
    %cst_24 = arith.constant dense<0.000000e+00> : vector<16x16xf32>
    %69 = tpu.matmul %66, %67, %cst_24 {dimension_numbers = #tpu.dot_dimension_numbers<[1], [1], [0], [0], [0, 0, 1, 0], [], []>} : vector<16x16xf32>, vector<16x16xf32>, vector<16x16xf32> -> vector<16x16xf32>
    %cst_25 = arith.constant 2.500000e-01 : f32
    %70 = vector.broadcast %cst_25 : f32 to vector<16x16xf32>
    %71 = arith.mulf %69, %70 : vector<16x16xf32>
    %72 = arith.addf %71, %31 : vector<16x16xf32>
    %cst_26 = arith.constant dense<0xFF800000> : vector<16xf32>
    %73 = vector.multi_reduction <maximumf>, %72, %cst_26 [1] : vector<16x16xf32> to vector<16xf32>
    %74 = vector.shape_cast %73 : vector<16xf32> to vector<16x1xf32>
    %75 = vector.broadcast %74 : vector<16x1xf32> to vector<16x16xf32>
    %76 = arith.subf %72, %75 : vector<16x16xf32>
    %77 = math.exp %76 : vector<16x16xf32>
    %cst_27 = arith.constant dense<0.000000e+00> : vector<16xf32>
    %78 = vector.multi_reduction <add>, %77, %cst_27 [1] : vector<16x16xf32> to vector<16xf32>
    %79 = vector.shape_cast %78 : vector<16xf32> to vector<16x1xf32>
    %80 = vector.broadcast %79 : vector<16x1xf32> to vector<16x16xf32>
    %81 = arith.divf %77, %80 : vector<16x16xf32>
    %cst_28 = arith.constant dense<0.000000e+00> : vector<16x16xf32>
    %82 = tpu.matmul %81, %68, %cst_28 {dimension_numbers = #tpu.dot_dimension_numbers<[1], [0], [0], [1], [0, 0, 1, 1], [], []>} : vector<16x16xf32>, vector<16x16xf32>, vector<16x16xf32> -> vector<16x16xf32>
    %83 = vector.extract_strided_slice %25 {offsets = [0, 48], sizes = [16, 16], strides = [1, 1]} : vector<16x64xf32> to vector<16x16xf32>
    %84 = vector.extract_strided_slice %30 {offsets = [0, 16], sizes = [16, 16], strides = [1, 1]} : vector<16x32xf32> to vector<16x16xf32>
    %85 = vector.extract_strided_slice %18 {offsets = [0, 16], sizes = [16, 16], strides = [1, 1]} : vector<16x32xf32> to vector<16x16xf32>
    %cst_29 = arith.constant dense<0.000000e+00> : vector<16x16xf32>
    %86 = tpu.matmul %83, %84, %cst_29 {dimension_numbers = #tpu.dot_dimension_numbers<[1], [1], [0], [0], [0, 0, 1, 0], [], []>} : vector<16x16xf32>, vector<16x16xf32>, vector<16x16xf32> -> vector<16x16xf32>
    %cst_30 = arith.constant 2.500000e-01 : f32
    %87 = vector.broadcast %cst_30 : f32 to vector<16x16xf32>
    %88 = arith.mulf %86, %87 : vector<16x16xf32>
    %89 = arith.addf %88, %31 : vector<16x16xf32>
    %cst_31 = arith.constant dense<0xFF800000> : vector<16xf32>
    %90 = vector.multi_reduction <maximumf>, %89, %cst_31 [1] : vector<16x16xf32> to vector<16xf32>
    %91 = vector.shape_cast %90 : vector<16xf32> to vector<16x1xf32>
    %92 = vector.broadcast %91 : vector<16x1xf32> to vector<16x16xf32>
    %93 = arith.subf %89, %92 : vector<16x16xf32>
    %94 = math.exp %93 : vector<16x16xf32>
    %cst_32 = arith.constant dense<0.000000e+00> : vector<16xf32>
    %95 = vector.multi_reduction <add>, %94, %cst_32 [1] : vector<16x16xf32> to vector<16xf32>
    %96 = vector.shape_cast %95 : vector<16xf32> to vector<16x1xf32>
    %97 = vector.broadcast %96 : vector<16x1xf32> to vector<16x16xf32>
    %98 = arith.divf %94, %97 : vector<16x16xf32>
    %cst_33 = arith.constant dense<0.000000e+00> : vector<16x16xf32>
    %99 = tpu.matmul %98, %85, %cst_33 {dimension_numbers = #tpu.dot_dimension_numbers<[1], [0], [0], [1], [0, 0, 1, 1], [], []>} : vector<16x16xf32>, vector<16x16xf32>, vector<16x16xf32> -> vector<16x16xf32>
    %100 = tpu.concatenate %48, %65, %82, %99 in 1 : vector<16x16xf32>, vector<16x16xf32>, vector<16x16xf32>, vector<16x16xf32> -> vector<16x64xf32>
    %c0_34 = arith.constant 0 : index
    %c0_35 = arith.constant 0 : index
    %101 = vector.load %arg4[%c0_34, %c0_35] : memref<64x64xf32, #tpu.memory_space<vmem>>, vector<64x64xf32>
    %cst_36 = arith.constant dense<0.000000e+00> : vector<16x64xf32>
    %102 = tpu.matmul %100, %101, %cst_36 {dimension_numbers = #tpu.dot_dimension_numbers<[1], [0], [0], [1], [0, 0, 1, 1], [], []>} : vector<16x64xf32>, vector<64x64xf32>, vector<16x64xf32> -> vector<16x64xf32>
    %103 = arith.addf %0, %102 : vector<16x64xf32>
    %c0_37 = arith.constant 0 : index
    %c0_38 = arith.constant 0 : index
    %104 = vector.load %arg2[%c0_37, %c0_38] : memref<1x64xf32, #tpu.memory_space<vmem>>, vector<1x64xf32>
    %105 = arith.mulf %103, %103 : vector<16x64xf32>
    %cst_39 = arith.constant dense<0.000000e+00> : vector<16xf32>
    %106 = vector.multi_reduction <add>, %105, %cst_39 [1] : vector<16x64xf32> to vector<16xf32>
    %107 = vector.shape_cast %106 : vector<16xf32> to vector<16x1xf32>
    %cst_40 = arith.constant 6.400000e+01 : f32
    %108 = vector.broadcast %cst_40 : f32 to vector<16x1xf32>
    %109 = arith.divf %107, %108 : vector<16x1xf32>
    %cst_41 = arith.constant 9.99999974E-6 : f32
    %110 = vector.broadcast %cst_41 : f32 to vector<16x1xf32>
    %111 = arith.addf %109, %110 : vector<16x1xf32>
    %112 = math.rsqrt %111 : vector<16x1xf32>
    %113 = vector.broadcast %112 : vector<16x1xf32> to vector<16x64xf32>
    %114 = arith.mulf %103, %113 : vector<16x64xf32>
    %115 = vector.broadcast %104 : vector<1x64xf32> to vector<16x64xf32>
    %116 = arith.mulf %114, %115 : vector<16x64xf32>
    %c0_42 = arith.constant 0 : index
    %c0_43 = arith.constant 0 : index
    %117 = vector.load %arg5[%c0_42, %c0_43] : memref<64x256xf32, #tpu.memory_space<vmem>>, vector<64x256xf32>
    %cst_44 = arith.constant dense<0.000000e+00> : vector<16x256xf32>
    %118 = tpu.matmul %116, %117, %cst_44 {dimension_numbers = #tpu.dot_dimension_numbers<[1], [0], [0], [1], [0, 0, 1, 1], [], []>} : vector<16x64xf32>, vector<64x256xf32>, vector<16x256xf32> -> vector<16x256xf32>
    %119 = vector.extract_strided_slice %118 {offsets = [0, 0], sizes = [16, 128], strides = [1, 1]} : vector<16x256xf32> to vector<16x128xf32>
    %120 = vector.extract_strided_slice %118 {offsets = [0, 128], sizes = [16, 128], strides = [1, 1]} : vector<16x256xf32> to vector<16x128xf32>
    %121 = arith.negf %119 : vector<16x128xf32>
    %122 = math.exp %121 : vector<16x128xf32>
    %cst_45 = arith.constant 1.000000e+00 : f32
    %123 = vector.broadcast %cst_45 : f32 to vector<16x128xf32>
    %124 = arith.addf %123, %122 : vector<16x128xf32>
    %125 = arith.divf %123, %124 : vector<16x128xf32>
    %126 = arith.mulf %119, %125 : vector<16x128xf32>
    %127 = arith.mulf %126, %120 : vector<16x128xf32>
    %c0_46 = arith.constant 0 : index
    %c0_47 = arith.constant 0 : index
    %128 = vector.load %arg6[%c0_46, %c0_47] : memref<128x64xf32, #tpu.memory_space<vmem>>, vector<128x64xf32>
    %cst_48 = arith.constant dense<0.000000e+00> : vector<16x64xf32>
    %129 = tpu.matmul %127, %128, %cst_48 {dimension_numbers = #tpu.dot_dimension_numbers<[1], [0], [0], [1], [0, 0, 1, 1], [], []>} : vector<16x128xf32>, vector<128x64xf32>, vector<16x64xf32> -> vector<16x64xf32>
    %130 = arith.addf %103, %129 : vector<16x64xf32>
    %c0_49 = arith.constant 0 : index
    %c0_50 = arith.constant 0 : index
    %131 = vector.load %arg10[%c0_49, %c0_50] : memref<16x64xf32, #tpu.memory_space<vmem>>, vector<16x64xf32>
    tpu.vector_store %arg10[%c0_49, %c0_50], %130 {strides = array<i32>} : memref<16x64xf32, #tpu.memory_space<vmem>>, vector<16x64xf32>,
    return
  }
}

</mosaic_0001>

<llo_original>
// kernel: tpu_custom_call.1
$region0: #{tpu_custom_call.1}
  #allocation0 [shape = 'u32[]', space=smem, size = 0x4, offset = 0x4, fixed_abs, tag = 'smem constant byte address 0x4 - core index']
  #allocation1 [shape = 'u32[144,128]{1,0:T(1,128)}', space=vmem, size = 0x12000, scoped, tag = 'internal scratch']
  %s0 = inlined_call_operand.hbm [shape: f32[16,64], index: 0, kind: input, shape index: {}]
  %s1 = inlined_call_operand.vmem [shape: f32[1,64], index: 1, kind: input, shape index: {}]
  %s2 = inlined_call_operand.vmem [shape: f32[1,64], index: 2, kind: input, shape index: {}]
  %s3 = inlined_call_operand.vmem [shape: f32[64,224], index: 3, kind: input, shape index: {}]
  %s4 = inlined_call_operand.vmem [shape: f32[64,64], index: 4, kind: input, shape index: {}]
  %s5 = inlined_call_operand.hbm [shape: f32[64,256], index: 5, kind: input, shape index: {}]
  %s6 = inlined_call_operand.vmem [shape: f32[128,64], index: 6, kind: input, shape index: {}]
  %s7 = inlined_call_operand.vmem [shape: f32[16,64], index: 7, kind: input, shape index: {}]
  %s8 = inlined_call_operand.hbm [shape: f32[16,64], index: 8, kind: input, shape index: {}]
  %s9 = inlined_call_operand.vmem [shape: f32[16,16], index: 9, kind: input, shape index: {}]
  %s10 = inlined_call_operand.hbm [shape: f32[16,64], index: 10, kind: output, shape index: {}]
  %s11 = sld [smem:[#allocation0]]
  $region62: #{tpu_custom_call.1} parent=0
    _
  %s13 = ssub.s32 1, %s11
  %s14 = scalar_select 0, %s13, %s11
  $region1: #{tpu_custom_call.1} parent=0
    #allocation2 [shape = 'u8[8192]{0}', space=vmem, size = 0x2000, scoped, tag = 'input window, operand 0, single buffered']
    #allocation3 [shape = 's32[1]{0}', space=sflag, size = 0x4, scoped, tag = 'scoped memory for tpu_custom_call.1']
    #allocation4 [shape = 's32[1]{0}', space=sflag, size = 0x4, scoped, tag = 'scoped memory for tpu_custom_call.1']
    #allocation5 [shape = 'u8[65536]{0}', space=vmem, size = 0x10000, scoped, tag = 'input window, operand 5, single buffered']
    #allocation6 [shape = 's32[1]{0}', space=sflag, size = 0x4, scoped, tag = 'scoped memory for tpu_custom_call.1']
    #allocation7 [shape = 'u8[8192]{0}', space=vmem, size = 0x2000, scoped, tag = 'input window, operand 8, single buffered']
    #allocation8 [shape = 'u8[8192]{0}', space=vmem, size = 0x2000, scoped, tag = 'output window, operand 0, single buffered']
    %15 = vsyncpa [#allocation3], 0
    %16 = vsyncpa [#allocation6], 0
    %17 = vsyncpa [#allocation4], 0
    // Predicated region
    $region2: #{tpu_custom_call.1} parent=1 // pred_check
      _
    $region3: #{tpu_custom_call.1} parent=1 // pred_check_branch
      %19 = sbr.rel (0) target = $region5
    $region4: #{tpu_custom_call.1} parent=1 // pred_region
      %s21 = ssub.s32 256, 256
      %22 = vsyncadd [#allocation3], %s21
      %s23 = sshll.u32 [#allocation2], 4
      %s24 = int_to_ptr.vmem [resolvable:$true] %s23
      %29 = dma.hbm_to_vmem [thread:$0]  %s0, 256, %s24, [#allocation3], 128, 128, 8
    $region5: #{tpu_custom_call.1} parent=1 // pred_fallthru
      _
    // Predicated region
    $region6: #{tpu_custom_call.1} parent=1 // pred_check
      _
    $region7: #{tpu_custom_call.1} parent=1 // pred_check_branch
      %31 = sbr.rel (0) target = $region9
    $region8: #{tpu_custom_call.1} parent=1 // pred_region
      _
    $region9: #{tpu_custom_call.1} parent=1 // pred_fallthru
      _
    // Predicated region
    $region10: #{tpu_custom_call.1} parent=1 // pred_check
      _
    $region11: #{tpu_custom_call.1} parent=1 // pred_check_branch
      %33 = sbr.rel (0) target = $region13
    $region12: #{tpu_custom_call.1} parent=1 // pred_region
      _
    $region13: #{tpu_custom_call.1} parent=1 // pred_fallthru
      _
    // Predicated region
    $region14: #{tpu_custom_call.1} parent=1 // pred_check
      _
    $region15: #{tpu_custom_call.1} parent=1 // pred_check_branch
      %35 = sbr.rel (0) target = $region17
    $region16: #{tpu_custom_call.1} parent=1 // pred_region
      _
    $region17: #{tpu_custom_call.1} parent=1 // pred_fallthru
      _
    // Predicated region
    $region18: #{tpu_custom_call.1} parent=1 // pred_check
      _
    $region19: #{tpu_custom_call.1} parent=1 // pred_check_branch
      %37 = sbr.rel (0) target = $region21
    $region20: #{tpu_custom_call.1} parent=1 // pred_region
      _
    $region21: #{tpu_custom_call.1} parent=1 // pred_fallthru
      _
    // Predicated region
    $region22: #{tpu_custom_call.1} parent=1 // pred_check
      _
    $region23: #{tpu_custom_call.1} parent=1 // pred_check_branch
      %39 = sbr.rel (0) target = $region25
    $region24: #{tpu_custom_call.1} parent=1 // pred_region
      %s41 = ssub.s32 2048, 2048
      %42 = vsyncadd [#allocation6], %s41
      %s43 = sshll.u32 [#allocation5], 4
      %s44 = int_to_ptr.vmem [resolvable:$true] %s43
      %49 = dma.hbm_to_vmem [thread:$0]  %s5, 2048, %s44, [#allocation6], 256, 256, 16
    $region25: #{tpu_custom_call.1} parent=1 // pred_fallthru
      _
    // Predicated region
    $region26: #{tpu_custom_call.1} parent=1 // pred_check
      _
    $region27: #{tpu_custom_call.1} parent=1 // pred_check_branch
      %51 = sbr.rel (0) target = $region29
    $region28: #{tpu_custom_call.1} parent=1 // pred_region
      _
    $region29: #{tpu_custom_call.1} parent=1 // pred_fallthru
      _
    // Predicated region
    $region30: #{tpu_custom_call.1} parent=1 // pred_check
      _
    $region31: #{tpu_custom_call.1} parent=1 // pred_check_branch
      %53 = sbr.rel (0) target = $region33
    $region32: #{tpu_custom_call.1} parent=1 // pred_region
      _
    $region33: #{tpu_custom_call.1} parent=1 // pred_fallthru
      _
    // Predicated region
    $region34: #{tpu_custom_call.1} parent=1 // pred_check
      _
    $region35: #{tpu_custom_call.1} parent=1 // pred_check_branch
      %55 = sbr.rel (0) target = $region37
    $region36: #{tpu_custom_call.1} parent=1 // pred_region
      %s57 = ssub.s32 256, 256
      %58 = vsyncadd [#allocation6], %s57
      %s59 = sshll.u32 [#allocation7], 4
      %s60 = int_to_ptr.vmem [resolvable:$true] %s59
      %65 = dma.hbm_to_vmem [thread:$0]  %s8, 256, %s60, [#allocation6], 128, 128, 8
    $region37: #{tpu_custom_call.1} parent=1 // pred_fallthru
      _
    // Predicated region
    $region38: #{tpu_custom_call.1} parent=1 // pred_check
      _
    $region39: #{tpu_custom_call.1} parent=1 // pred_check_branch
      %67 = sbr.rel (0) target = $region41
    $region40: #{tpu_custom_call.1} parent=1 // pred_region
      _
    $region41: #{tpu_custom_call.1} parent=1 // pred_fallthru
      _
    // Predicated region
    $region42: #{tpu_custom_call.1} parent=1 // pred_check
      _
    $region43: #{tpu_custom_call.1} parent=1 // pred_check_branch
      %69 = sbr.rel (0) target = $region45
    $region44: #{tpu_custom_call.1} parent=1 // pred_region
      %70 = dma.done [#allocation3], 256
    $region45: #{tpu_custom_call.1} parent=1 // pred_fallthru
      _
    // Predicated region
    $region46: #{tpu_custom_call.1} parent=1 // pred_check
      _
    $region47: #{tpu_custom_call.1} parent=1 // pred_check_branch
      %72 = sbr.rel (0) target = $region49
    $region48: #{tpu_custom_call.1} parent=1 // pred_region
      %73 = dma.done [#allocation6], 2048
    $region49: #{tpu_custom_call.1} parent=1 // pred_fallthru
      _
    // Predicated region
    $region50: #{tpu_custom_call.1} parent=1 // pred_check
      _
    $region51: #{tpu_custom_call.1} parent=1 // pred_check_branch
      %75 = sbr.rel (0) target = $region53
    $region52: #{tpu_custom_call.1} parent=1 // pred_region
      %76 = dma.done [#allocation6], 256
    $region53: #{tpu_custom_call.1} parent=1 // pred_fallthru
      _
    %v77 = vld [vmem:[#allocation2] sm:$0xff]
    %v78 = vld [vmem:[#allocation2 + $0x8] sm:$0xff]
    %v79 = vld [vmem:[%s1] sm:$0x1]
    %v80 = vmul.f32 %v77, %v77
    %v81 = vmul.f32 %v78, %v78
    %vm82 = vcmask 523264
    %v83 = vsel %vm82, %v80, 0.0
    %84 = vadd.xlane.f32.xlu0 %v83
    %v85 = vpop.xlane.xlu0 %84
    %v86 = vsel %vm82, %v81, 0.0
    %87 = vadd.xlane.f32.xlu0 %v86
    %v88 = vpop.xlane.xlu0 %87
    %v89 = vrcp.pop 64.0
    %v90 = vmul.f32 %v85, %v89
    %v91 = vmul.f32 %v88, %v89
    %v92 = vadd.f32 %v90, 1e-05
    %v93 = vadd.f32 %v91, 1e-05
    %v94 = vrsqrt.pop %v92
    %v95 = vrsqrt.pop %v93
    %v96 = vmul.f32 %v77, %v94
    %v97 = vmul.f32 %v78, %v95
    %v99 = vlaneseq
    %v100 = vshrl.u32 %v99, 7
    %v101 = vsub.s32 0, %v100
    %v102 = vrot.slane %v79, %v101
    %v104 = vmul.f32 %v96, %v102
    %v105 = vmul.f32 %v97, %v102
    %v106 = vld [vmem:[%s3] sm:$0xff]
    %v107 = vld [vmem:[%s3 + $0x8] sm:$0xff]
    %v108 = vld [vmem:[%s3 + $0x10] sm:$0xff]
    %v109 = vld [vmem:[%s3 + $0x18] sm:$0xff]
    %v110 = vld [vmem:[%s3 + $0x20] sm:$0xff]
    %v111 = vld [vmem:[%s3 + $0x28] sm:$0xff]
    %v112 = vld [vmem:[%s3 + $0x30] sm:$0xff]
    %v113 = vld [vmem:[%s3 + $0x38] sm:$0xff]
    %v114 = vld [vmem:[%s3 + $0x40] sm:$0xff]
    %v115 = vld [vmem:[%s3 + $0x48] sm:$0xff]
    %v116 = vld [vmem:[%s3 + $0x50] sm:$0xff]
    %v117 = vld [vmem:[%s3 + $0x58] sm:$0xff]
    %v118 = vld [vmem:[%s3 + $0x60] sm:$0xff]
    %v119 = vld [vmem:[%s3 + $0x68] sm:$0xff]
    %v120 = vld [vmem:[%s3 + $0x70] sm:$0xff]
    %v121 = vld [vmem:[%s3 + $0x78] sm:$0xff]
    %v123 = vsel %vm82, %v104, 0
    %v126 = vsel %vm82, %v105, 0
    %128 = vmatprep.subr.mxu0 %v107
    %129 = vmatpush1.msra.mxu0 %v106
    %130 = vmatprep.subr.mxu0 %v109
    %131 = vmatpush1.msra.mxu0 %v108
    %132 = vmatprep.subr.mxu0 %v111
    %133 = vmatpush1.msra.mxu0 %v110
    %134 = vmatprep.subr.mxu0 %v113
    %135 = vmatpush1.msra.mxu0 %v112
    %136 = vmatprep.subr.mxu0 %v115
    %137 = vmatpush1.msra.mxu0 %v114
    %138 = vmatprep.subr.mxu0 %v117
    %139 = vmatpush1.msra.mxu0 %v116
    %140 = vmatprep.subr.mxu0 %v119
    %141 = vmatpush1.msra.mxu0 %v118
    %142 = vmatprep.subr.mxu0 %v121
    %143 = vmatpush1.msra.mxu0 %v120
    %144 = vmatprep.subr.mxu0 0.0
    %145 = vmatpush1.msra.mxu0 0.0
    %146 = vmatprep.subr.mxu0 0.0
    %147 = vmatpush1.msra.mxu0 0.0
    %148 = vmatprep.subr.mxu0 0.0
    %149 = vmatpush1.msra.mxu0 0.0
    %150 = vmatprep.subr.mxu0 0.0
    %151 = vmatpush1.msra.mxu0 0.0
    %152 = vmatprep.subr.mxu0 0.0
    %153 = vmatpush1.msra.mxu0 0.0
    %154 = vmatprep.subr.mxu0 0.0
    %155 = vmatpush1.msra.mxu0 0.0
    %156 = vmatprep.subr.mxu0 0.0
    %157 = vmatpush1.msra.mxu0 0.0
    %158 = vmatprep.subr.mxu0 0.0
    %159 = vmatpush1.msra.mxu0 0.0
    %160 = vmatprep.subr.mxu0 0.0
    %161 = vmatpush1.msra.mxu0 0.0
    %162 = vmatprep.subr.mxu0 0.0
    %163 = vmatpush1.msra.mxu0 0.0
    %164 = vmatprep.subr.mxu0 0.0
    %165 = vmatpush1.msra.mxu0 0.0
    %166 = vmatprep.subr.mxu0 0.0
    %167 = vmatpush1.msra.mxu0 0.0
    %168 = vmatprep.subr.mxu0 0.0
    %169 = vmatpush1.msra.mxu0 0.0
    %170 = vmatprep.subr.mxu0 0.0
    %171 = vmatpush1.msra.mxu0 0.0
    %172 = vmatprep.subr.mxu0 0.0
    %173 = vmatpush1.msra.mxu0 0.0
    %174 = vmatprep.subr.mxu0 0.0
    %175 = vmatpush1.msra.mxu0 0.0
    %176 = vmatprep.subr.mxu0 0.0
    %177 = vmatpush1.msra.mxu0 0.0
    %178 = vmatprep.subr.mxu0 0.0
    %179 = vmatpush1.msra.mxu0 0.0
    %180 = vmatprep.subr.mxu0 0.0
    %181 = vmatpush1.msra.mxu0 0.0
    %182 = vmatprep.subr.mxu0 0.0
    %183 = vmatpush1.msra.mxu0 0.0
    %184 = vmatprep.subr.mxu0 0.0
    %185 = vmatpush1.msra.mxu0 0.0
    %186 = vmatprep.subr.mxu0 0.0
    %187 = vmatpush1.msra.mxu0 0.0
    %188 = vmatprep.subr.mxu0 0.0
    %189 = vmatpush1.msra.mxu0 0.0
    %190 = vmatprep.subr.mxu0 0.0
    %191 = vmatpush1.msra.mxu0 0.0
    %192 = vmatprep.mubr.f32.mxu0 0.0
    %193 = vmatmul.mubr.f32.gmra.mrb[0].mxu0 %v123
    %v194 = vpop.f32.mrb[0].mxu0
    %v195 = vadd.f32 0.0, %v194
    %v196 = vpop.f32.mrb[0].mxu0
    %v197 = vadd.f32 0.0, %v196
    %198 = vmatprep.mubr.f32.mxu0 0.0
    %199 = vmatmul.mubr.f32.gmra.mrb[0].mxu0 %v126
    %v200 = vpop.f32.mrb[0].mxu0
    %v201 = vadd.f32 0.0, %v200
    %v202 = vpop.f32.mrb[0].mxu0
    %v203 = vadd.f32 0.0, %v202
    %204 = vdwg.mxu0
    %v205 = vld [vmem:[%s7] sm:$0xff]
    %v206 = vld [vmem:[%s7 + $0x8] sm:$0xff]
    %v207 = vld [vmem:[#allocation7] sm:$0xff]
    %v208 = vld [vmem:[#allocation7 + $0x8] sm:$0xff]
    %v209 = vmul.f32 %v195, %v205
    %v210 = vmul.f32 %v201, %v206
    %v211 = vmul.f32 %v197, %v207
    %v212 = vmul.f32 %v203, %v208
    %v213 = vadd.f32 %v209, %v211
    %v214 = vadd.f32 %v210, %v212
    %217 = vrot.lane.b32.xlu0 %v205, 64
    %v218 = vpop.permute.xlu0 %217
    %219 = vrot.lane.b32.xlu0 %v206, 64
    %v220 = vpop.permute.xlu0 %219
    %v223 = vmul.f32 %v195, %v218
    %v224 = vmul.f32 %v201, %v220
    %227 = vrot.lane.b32.xlu0 %v207, 64
    %v228 = vpop.permute.xlu0 %227
    %229 = vrot.lane.b32.xlu0 %v208, 64
    %v230 = vpop.permute.xlu0 %229
    %v233 = vmul.f32 %v197, %v228
    %v234 = vmul.f32 %v203, %v230
    %v235 = vadd.f32 %v223, %v233
    %v236 = vadd.f32 %v224, %v234
    %v237 = vld [vmem:[%s9] sm:$0xff]
    %v238 = vld [vmem:[%s9 + $0x8] sm:$0xff]
    %241 = vrot.lane.b32.xlu0 %v235, 64
    %v242 = vpop.permute.xlu0 %241
    %243 = vrot.lane.b32.xlu0 %v236, 64
    %v244 = vpop.permute.xlu0 %243
    %vm245 = vcmask 130048
    %v247 = vsel %vm245, %v213, 0
    %v250 = vsel %vm245, %v214, 0
    %v252 = vsel %vm245, %v242, 0
    %v254 = vsel %vm245, %v244, 0
    %256 = vmatprep.subr.mxu0 0.0
    %257 = vmatpush1.xpose.msra.mxu0 %v252
    %258 = vmatprep.subr.mxu0 0.0
    %259 = vmatpush1.xpose.msra.mxu0 %v254
    %260 = vmatprep.subr.mxu0 0.0
    %261 = vmatpush1.xpose.msra.mxu0 0.0
    %262 = vmatprep.subr.mxu0 0.0
    %263 = vmatpush1.xpose.msra.mxu0 0.0
    %264 = vmatprep.subr.mxu0 0.0
    %265 = vmatpush1.xpose.msra.mxu0 0.0
    %266 = vmatprep.subr.mxu0 0.0
    %267 = vmatpush1.xpose.msra.mxu0 0.0
    %268 = vmatprep.subr.mxu0 0.0
    %269 = vmatpush1.xpose.msra.mxu0 0.0
    %270 = vmatprep.subr.mxu0 0.0
    %271 = vmatpush1.xpose.msra.mxu0 0.0
    %272 = vmatprep.subr.mxu0 0.0
    %273 = vmatpush1.xpose.msra.mxu0 0.0
    %274 = vmatprep.subr.mxu0 0.0
    %275 = vmatpush1.xpose.msra.mxu0 0.0
    %276 = vmatprep.subr.mxu0 0.0
    %277 = vmatpush1.xpose.msra.mxu0 0.0
    %278 = vmatprep.subr.mxu0 0.0
    %279 = vmatpush1.xpose.msra.mxu0 0.0
    %280 = vmatprep.subr.mxu0 0.0
    %281 = vmatpush1.xpose.msra.mxu0 0.0
    %282 = vmatprep.subr.mxu0 0.0
    %283 = vmatpush1.xpose.msra.mxu0 0.0
    %284 = vmatprep.subr.mxu0 0.0
    %285 = vmatpush1.xpose.msra.mxu0 0.0
    %286 = vmatprep.subr.mxu0 0.0
    %287 = vmatpush1.xpose.msra.mxu0 0.0
    %288 = vmatprep.subr.mxu0 0.0
    %289 = vmatpush1.xpose.msra.mxu0 0.0
    %290 = vmatprep.subr.mxu0 0.0
    %291 = vmatpush1.xpose.msra.mxu0 0.0
    %292 = vmatprep.subr.mxu0 0.0
    %293 = vmatpush1.xpose.msra.mxu0 0.0
    %294 = vmatprep.subr.mxu0 0.0
    %295 = vmatpush1.xpose.msra.mxu0 0.0
    %296 = vmatprep.subr.mxu0 0.0
    %297 = vmatpush1.xpose.msra.mxu0 0.0
    %298 = vmatprep.subr.mxu0 0.0
    %299 = vmatpush1.xpose.msra.mxu0 0.0
    %300 = vmatprep.subr.mxu0 0.0
    %301 = vmatpush1.xpose.msra.mxu0 0.0
    %302 = vmatprep.subr.mxu0 0.0
    %303 = vmatpush1.xpose.msra.mxu0 0.0
    %304 = vmatprep.subr.mxu0 0.0
    %305 = vmatpush1.xpose.msra.mxu0 0.0
    %306 = vmatprep.subr.mxu0 0.0
    %307 = vmatpush1.xpose.msra.mxu0 0.0
    %308 = vmatprep.subr.mxu0 0.0
    %309 = vmatpush1.xpose.msra.mxu0 0.0
    %310 = vmatprep.subr.mxu0 0.0
    %311 = vmatpush1.xpose.msra.mxu0 0.0
    %312 = vmatprep.subr.mxu0 0.0
    %313 = vmatpush1.xpose.msra.mxu0 0.0
    %314 = vmatprep.subr.mxu0 0.0
    %315 = vmatpush1.xpose.msra.mxu0 0.0
    %316 = vmatprep.subr.mxu0 0.0
    %317 = vmatpush1.xpose.msra.mxu0 0.0
    %318 = vmatprep.subr.mxu0 0.0
    %319 = vmatpush1.xpose.msra.mxu0 0.0
    %320 = vmatprep.mubr.f32.mxu0 0.0
    %321 = vmatmul.mubr.f32.gmra.mrb[0].mxu0 %v247
    %v322 = vpop.f32.mrb[0].mxu0
    %v323 = vadd.f32 0.0, %v322
    %v324 = vpop.f32.mrb[0].mxu0
    %325 = vmatprep.mubr.f32.mxu0 0.0
    %326 = vmatmul.mubr.f32.gmra.mrb[0].mxu0 %v250
    %v327 = vpop.f32.mrb[0].mxu0
    %v328 = vadd.f32 0.0, %v327
    %v329 = vpop.f32.mrb[0].mxu0
    %330 = vdwg.mxu0
    %v331 = vmul.f32 %v323, 0.25
    %v332 = vmul.f32 %v328, 0.25
    %v333 = vadd.f32 %v331, %v237
    %v334 = vadd.f32 %v332, %v238
    %v335 = vsel %vm245, %v333, -inf
    %336 = vmax.xlane.f32.xlu0 %v335
    %v337 = vpop.xlane.xlu0 %336
    %v338 = vsel %vm245, %v334, -inf
    %339 = vmax.xlane.f32.xlu0 %v338
    %v340 = vpop.xlane.xlu0 %339
    %v341 = vsub.f32 %v333, %v337
    %v342 = vsub.f32 %v334, %v340
    %v343 = vmul.f32 %v341, 1.442695
    %v344 = vpow.pop %v343
    %v345 = vmul.f32 %v342, 1.442695
    %v346 = vpow.pop %v345
    %v347 = vsel %vm245, %v344, 0.0
    %348 = vadd.xlane.f32.xlu0 %v347
    %v349 = vpop.xlane.xlu0 %348
    %v350 = vsel %vm245, %v346, 0.0
    %351 = vadd.xlane.f32.xlu0 %v350
    %v352 = vpop.xlane.xlu0 %351
    %v353 = vrcp.pop %v349
    %v354 = vmul.f32 %v344, %v353
    %v355 = vrcp.pop %v352
    %v356 = vmul.f32 %v346, %v355
    %359 = vrot.lane.b32.xlu0 %v195, 32
    %v360 = vpop.permute.xlu0 %359
    %361 = vrot.lane.b32.xlu0 %v201, 32
    %v362 = vpop.permute.xlu0 %361
    %v366 = vsel %vm245, %v354, 0
    %v369 = vsel %vm245, %v356, 0
    %371 = vmatprep.subr.mxu0 0.0
    %372 = vmatpush1.msra.mxu0 %v360
    %373 = vmatprep.subr.mxu0 0.0
    %374 = vmatpush1.msra.mxu0 %v362
    %375 = vmatprep.subr.mxu0 0.0
    %376 = vmatpush1.msra.mxu0 0.0
    %377 = vmatprep.subr.mxu0 0.0
    %378 = vmatpush1.msra.mxu0 0.0
    %379 = vmatprep.subr.mxu0 0.0
    %380 = vmatpush1.msra.mxu0 0.0
    %381 = vmatprep.subr.mxu0 0.0
    %382 = vmatpush1.msra.mxu0 0.0
    %383 = vmatprep.subr.mxu0 0.0
    %384 = vmatpush1.msra.mxu0 0.0
    %385 = vmatprep.subr.mxu0 0.0
    %386 = vmatpush1.msra.mxu0 0.0
    %387 = vmatprep.subr.mxu0 0.0
    %388 = vmatpush1.msra.mxu0 0.0
    %389 = vmatprep.subr.mxu0 0.0
    %390 = vmatpush1.msra.mxu0 0.0
    %391 = vmatprep.subr.mxu0 0.0
    %392 = vmatpush1.msra.mxu0 0.0
    %393 = vmatprep.subr.mxu0 0.0
    %394 = vmatpush1.msra.mxu0 0.0
    %395 = vmatprep.subr.mxu0 0.0
    %396 = vmatpush1.msra.mxu0 0.0
    %397 = vmatprep.subr.mxu0 0.0
    %398 = vmatpush1.msra.mxu0 0.0
    %399 = vmatprep.subr.mxu0 0.0
    %400 = vmatpush1.msra.mxu0 0.0
    %401 = vmatprep.subr.mxu0 0.0
    %402 = vmatpush1.msra.mxu0 0.0
    %403 = vmatprep.subr.mxu0 0.0
    %404 = vmatpush1.msra.mxu0 0.0
    %405 = vmatprep.subr.mxu0 0.0
    %406 = vmatpush1.msra.mxu0 0.0
    %407 = vmatprep.subr.mxu0 0.0
    %408 = vmatpush1.msra.mxu0 0.0
    %409 = vmatprep.subr.mxu0 0.0
    %410 = vmatpush1.msra.mxu0 0.0
    %411 = vmatprep.subr.mxu0 0.0
    %412 = vmatpush1.msra.mxu0 0.0
    %413 = vmatprep.subr.mxu0 0.0
    %414 = vmatpush1.msra.mxu0 0.0
    %415 = vmatprep.subr.mxu0 0.0
    %416 = vmatpush1.msra.mxu0 0.0
    %417 = vmatprep.subr.mxu0 0.0
    %418 = vmatpush1.msra.mxu0 0.0
    %419 = vmatprep.subr.mxu0 0.0
    %420 = vmatpush1.msra.mxu0 0.0
    %421 = vmatprep.subr.mxu0 0.0
    %422 = vmatpush1.msra.mxu0 0.0
    %423 = vmatprep.subr.mxu0 0.0
    %424 = vmatpush1.msra.mxu0 0.0
    %425 = vmatprep.subr.mxu0 0.0
    %426 = vmatpush1.msra.mxu0 0.0
    %427 = vmatprep.subr.mxu0 0.0
    %428 = vmatpush1.msra.mxu0 0.0
    %429 = vmatprep.subr.mxu0 0.0
    %430 = vmatpush1.msra.mxu0 0.0
    %431 = vmatprep.subr.mxu0 0.0
    %432 = vmatpush1.msra.mxu0 0.0
    %433 = vmatprep.subr.mxu0 0.0
    %434 = vmatpush1.msra.mxu0 0.0
    %435 = vmatprep.mubr.f32.mxu0 0.0
    %436 = vmatmul.mubr.f32.gmra.mrb[0].mxu0 %v366
    %v437 = vpop.f32.mrb[0].mxu0
    %v438 = vadd.f32 0.0, %v437
    %v439 = vpop.f32.mrb[0].mxu0
    %440 = vmatprep.mubr.f32.mxu0 0.0
    %441 = vmatmul.mubr.f32.gmra.mrb[0].mxu0 %v369
    %v442 = vpop.f32.mrb[0].mxu0
    %v443 = vadd.f32 0.0, %v442
    %v444 = vpop.f32.mrb[0].mxu0
    %445 = vdwg.mxu0
    %446 = vrot.lane.b32.xlu0 %v213, 112
    %v447 = vpop.permute.xlu0 %446
    %448 = vrot.lane.b32.xlu0 %v214, 112
    %v449 = vpop.permute.xlu0 %448
    %v450 = vsel %vm245, %v447, 0
    %v452 = vsel %vm245, %v449, 0
    %454 = vmatprep.subr.mxu0 0.0
    %455 = vmatpush1.xpose.msra.mxu0 %v252
    %456 = vmatprep.subr.mxu0 0.0
    %457 = vmatpush1.xpose.msra.mxu0 %v254
    %458 = vmatprep.subr.mxu0 0.0
    %459 = vmatpush1.xpose.msra.mxu0 0.0
    %460 = vmatprep.subr.mxu0 0.0
    %461 = vmatpush1.xpose.msra.mxu0 0.0
    %462 = vmatprep.subr.mxu0 0.0
    %463 = vmatpush1.xpose.msra.mxu0 0.0
    %464 = vmatprep.subr.mxu0 0.0
    %465 = vmatpush1.xpose.msra.mxu0 0.0
    %466 = vmatprep.subr.mxu0 0.0
    %467 = vmatpush1.xpose.msra.mxu0 0.0
    %468 = vmatprep.subr.mxu0 0.0
    %469 = vmatpush1.xpose.msra.mxu0 0.0
    %470 = vmatprep.subr.mxu0 0.0
    %471 = vmatpush1.xpose.msra.mxu0 0.0
    %472 = vmatprep.subr.mxu0 0.0
    %473 = vmatpush1.xpose.msra.mxu0 0.0
    %474 = vmatprep.subr.mxu0 0.0
    %475 = vmatpush1.xpose.msra.mxu0 0.0
    %476 = vmatprep.subr.mxu0 0.0
    %477 = vmatpush1.xpose.msra.mxu0 0.0
    %478 = vmatprep.subr.mxu0 0.0
    %479 = vmatpush1.xpose.msra.mxu0 0.0
    %480 = vmatprep.subr.mxu0 0.0
    %481 = vmatpush1.xpose.msra.mxu0 0.0
    %482 = vmatprep.subr.mxu0 0.0
    %483 = vmatpush1.xpose.msra.mxu0 0.0
    %484 = vmatprep.subr.mxu0 0.0
    %485 = vmatpush1.xpose.msra.mxu0 0.0
    %486 = vmatprep.subr.mxu0 0.0
    %487 = vmatpush1.xpose.msra.mxu0 0.0
    %488 = vmatprep.subr.mxu0 0.0
    %489 = vmatpush1.xpose.msra.mxu0 0.0
    %490 = vmatprep.subr.mxu0 0.0
    %491 = vmatpush1.xpose.msra.mxu0 0.0
    %492 = vmatprep.subr.mxu0 0.0
    %493 = vmatpush1.xpose.msra.mxu0 0.0
    %494 = vmatprep.subr.mxu0 0.0
    %495 = vmatpush1.xpose.msra.mxu0 0.0
    %496 = vmatprep.subr.mxu0 0.0
    %497 = vmatpush1.xpose.msra.mxu0 0.0
    %498 = vmatprep.subr.mxu0 0.0
    %499 = vmatpush1.xpose.msra.mxu0 0.0
    %500 = vmatprep.subr.mxu0 0.0
    %501 = vmatpush1.xpose.msra.mxu0 0.0
    %502 = vmatprep.subr.mxu0 0.0
    %503 = vmatpush1.xpose.msra.mxu0 0.0
    %504 = vmatprep.subr.mxu0 0.0
    %505 = vmatpush1.xpose.msra.mxu0 0.0
    %506 = vmatprep.subr.mxu0 0.0
    %507 = vmatpush1.xpose.msra.mxu0 0.0
    %508 = vmatprep.subr.mxu0 0.0
    %509 = vmatpush1.xpose.msra.mxu0 0.0
    %510 = vmatprep.subr.mxu0 0.0
    %511 = vmatpush1.xpose.msra.mxu0 0.0
    %512 = vmatprep.subr.mxu0 0.0
    %513 = vmatpush1.xpose.msra.mxu0 0.0
    %514 = vmatprep.subr.mxu0 0.0
    %515 = vmatpush1.xpose.msra.mxu0 0.0
    %516 = vmatprep.subr.mxu0 0.0
    %517 = vmatpush1.xpose.msra.mxu0 0.0
    %518 = vmatprep.mubr.f32.mxu0 0.0
    %519 = vmatmul.mubr.f32.gmra.mrb[0].mxu0 %v450
    %v520 = vpop.f32.mrb[0].mxu0
    %v521 = vadd.f32 0.0, %v520
    %v522 = vpop.f32.mrb[0].mxu0
    %523 = vmatprep.mubr.f32.mxu0 0.0
    %524 = vmatmul.mubr.f32.gmra.mrb[0].mxu0 %v452
    %v525 = vpop.f32.mrb[0].mxu0
    %v526 = vadd.f32 0.0, %v525
    %v527 = vpop.f32.mrb[0].mxu0
    %528 = vdwg.mxu0
    %v529 = vmul.f32 %v521, 0.25
    %v530 = vmul.f32 %v526, 0.25
    %v531 = vadd.f32 %v529, %v237
    %v532 = vadd.f32 %v530, %v238
    %v533 = vsel %vm245, %v531, -inf
    %534 = vmax.xlane.f32.xlu0 %v533
    %v535 = vpop.xlane.xlu0 %534
    %v536 = vsel %vm245, %v532, -inf
    %537 = vmax.xlane.f32.xlu0 %v536
    %v538 = vpop.xlane.xlu0 %537
    %v539 = vsub.f32 %v531, %v535
    %v540 = vsub.f32 %v532, %v538
    %v541 = vmul.f32 %v539, 1.442695
    %v542 = vpow.pop %v541
    %v543 = vmul.f32 %v540, 1.442695
    %v544 = vpow.pop %v543
    %v545 = vsel %vm245, %v542, 0.0
    %546 = vadd.xlane.f32.xlu0 %v545
    %v547 = vpop.xlane.xlu0 %546
    %v548 = vsel %vm245, %v544, 0.0
    %549 = vadd.xlane.f32.xlu0 %v548
    %v550 = vpop.xlane.xlu0 %549
    %v551 = vrcp.pop %v547
    %v552 = vmul.f32 %v542, %v551
    %v553 = vrcp.pop %v550
    %v554 = vmul.f32 %v544, %v553
    %v556 = vsel %vm245, %v552, 0
    %v559 = vsel %vm245, %v554, 0
    %561 = vmatprep.subr.mxu0 0.0
    %562 = vmatpush1.msra.mxu0 %v360
    %563 = vmatprep.subr.mxu0 0.0
    %564 = vmatpush1.msra.mxu0 %v362
    %565 = vmatprep.subr.mxu0 0.0
    %566 = vmatpush1.msra.mxu0 0.0
    %567 = vmatprep.subr.mxu0 0.0
    %568 = vmatpush1.msra.mxu0 0.0
    %569 = vmatprep.subr.mxu0 0.0
    %570 = vmatpush1.msra.mxu0 0.0
    %571 = vmatprep.subr.mxu0 0.0
    %572 = vmatpush1.msra.mxu0 0.0
    %573 = vmatprep.subr.mxu0 0.0
    %574 = vmatpush1.msra.mxu0 0.0
    %575 = vmatprep.subr.mxu0 0.0
    %576 = vmatpush1.msra.mxu0 0.0
    %577 = vmatprep.subr.mxu0 0.0
    %578 = vmatpush1.msra.mxu0 0.0
    %579 = vmatprep.subr.mxu0 0.0
    %580 = vmatpush1.msra.mxu0 0.0
    %581 = vmatprep.subr.mxu0 0.0
    %582 = vmatpush1.msra.mxu0 0.0
    %583 = vmatprep.subr.mxu0 0.0
    %584 = vmatpush1.msra.mxu0 0.0
    %585 = vmatprep.subr.mxu0 0.0
    %586 = vmatpush1.msra.mxu0 0.0
    %587 = vmatprep.subr.mxu0 0.0
    %588 = vmatpush1.msra.mxu0 0.0
    %589 = vmatprep.subr.mxu0 0.0
    %590 = vmatpush1.msra.mxu0 0.0
    %591 = vmatprep.subr.mxu0 0.0
    %592 = vmatpush1.msra.mxu0 0.0
    %593 = vmatprep.subr.mxu0 0.0
    %594 = vmatpush1.msra.mxu0 0.0
    %595 = vmatprep.subr.mxu0 0.0
    %596 = vmatpush1.msra.mxu0 0.0
    %597 = vmatprep.subr.mxu0 0.0
    %598 = vmatpush1.msra.mxu0 0.0
    %599 = vmatprep.subr.mxu0 0.0
    %600 = vmatpush1.msra.mxu0 0.0
    %601 = vmatprep.subr.mxu0 0.0
    %602 = vmatpush1.msra.mxu0 0.0
    %603 = vmatprep.subr.mxu0 0.0
    %604 = vmatpush1.msra.mxu0 0.0
    %605 = vmatprep.subr.mxu0 0.0
    %606 = vmatpush1.msra.mxu0 0.0
    %607 = vmatprep.subr.mxu0 0.0
    %608 = vmatpush1.msra.mxu0 0.0
    %609 = vmatprep.subr.mxu0 0.0
    %610 = vmatpush1.msra.mxu0 0.0
    %611 = vmatprep.subr.mxu0 0.0
    %612 = vmatpush1.msra.mxu0 0.0
    %613 = vmatprep.subr.mxu0 0.0
    %614 = vmatpush1.msra.mxu0 0.0
    %615 = vmatprep.subr.mxu0 0.0
    %616 = vmatpush1.msra.mxu0 0.0
    %617 = vmatprep.subr.mxu0 0.0
    %618 = vmatpush1.msra.mxu0 0.0
    %619 = vmatprep.subr.mxu0 0.0
    %620 = vmatpush1.msra.mxu0 0.0
    %621 = vmatprep.subr.mxu0 0.0
    %622 = vmatpush1.msra.mxu0 0.0
    %623 = vmatprep.subr.mxu0 0.0
    %624 = vmatpush1.msra.mxu0 0.0
    %625 = vmatprep.mubr.f32.mxu0 0.0
    %626 = vmatmul.mubr.f32.gmra.mrb[0].mxu0 %v556
    %v627 = vpop.f32.mrb[0].mxu0
    %v628 = vadd.f32 0.0, %v627
    %v629 = vpop.f32.mrb[0].mxu0
    %630 = vmatprep.mubr.f32.mxu0 0.0
    %631 = vmatmul.mubr.f32.gmra.mrb[0].mxu0 %v559
    %v632 = vpop.f32.mrb[0].mxu0
    %v633 = vadd.f32 0.0, %v632
    %v634 = vpop.f32.mrb[0].mxu0
    %635 = vdwg.mxu0
    %636 = vrot.lane.b32.xlu0 %v213, 96
    %v637 = vpop.permute.xlu0 %636
    %638 = vrot.lane.b32.xlu0 %v214, 96
    %v639 = vpop.permute.xlu0 %638
    %640 = vrot.lane.b32.xlu0 %v235, 48
    %v641 = vpop.permute.xlu0 %640
    %642 = vrot.lane.b32.xlu0 %v236, 48
    %v643 = vpop.permute.xlu0 %642
    %v644 = vsel %vm245, %v637, 0
    %v646 = vsel %vm245, %v639, 0
    %v648 = vsel %vm245, %v641, 0
    %v650 = vsel %vm245, %v643, 0
    %652 = vmatprep.subr.mxu0 0.0
    %653 = vmatpush1.xpose.msra.mxu0 %v648
    %654 = vmatprep.subr.mxu0 0.0
    %655 = vmatpush1.xpose.msra.mxu0 %v650
    %656 = vmatprep.subr.mxu0 0.0
    %657 = vmatpush1.xpose.msra.mxu0 0.0
    %658 = vmatprep.subr.mxu0 0.0
    %659 = vmatpush1.xpose.msra.mxu0 0.0
    %660 = vmatprep.subr.mxu0 0.0
    %661 = vmatpush1.xpose.msra.mxu0 0.0
    %662 = vmatprep.subr.mxu0 0.0
    %663 = vmatpush1.xpose.msra.mxu0 0.0
    %664 = vmatprep.subr.mxu0 0.0
    %665 = vmatpush1.xpose.msra.mxu0 0.0
    %666 = vmatprep.subr.mxu0 0.0
    %667 = vmatpush1.xpose.msra.mxu0 0.0
    %668 = vmatprep.subr.mxu0 0.0
    %669 = vmatpush1.xpose.msra.mxu0 0.0
    %670 = vmatprep.subr.mxu0 0.0
    %671 = vmatpush1.xpose.msra.mxu0 0.0
    %672 = vmatprep.subr.mxu0 0.0
    %673 = vmatpush1.xpose.msra.mxu0 0.0
    %674 = vmatprep.subr.mxu0 0.0
    %675 = vmatpush1.xpose.msra.mxu0 0.0
    %676 = vmatprep.subr.mxu0 0.0
    %677 = vmatpush1.xpose.msra.mxu0 0.0
    %678 = vmatprep.subr.mxu0 0.0
    %679 = vmatpush1.xpose.msra.mxu0 0.0
    %680 = vmatprep.subr.mxu0 0.0
    %681 = vmatpush1.xpose.msra.mxu0 0.0
    %682 = vmatprep.subr.mxu0 0.0
    %683 = vmatpush1.xpose.msra.mxu0 0.0
    %684 = vmatprep.subr.mxu0 0.0
    %685 = vmatpush1.xpose.msra.mxu0 0.0
    %686 = vmatprep.subr.mxu0 0.0
    %687 = vmatpush1.xpose.msra.mxu0 0.0
    %688 = vmatprep.subr.mxu0 0.0
    %689 = vmatpush1.xpose.msra.mxu0 0.0
    %690 = vmatprep.subr.mxu0 0.0
    %691 = vmatpush1.xpose.msra.mxu0 0.0
    %692 = vmatprep.subr.mxu0 0.0
    %693 = vmatpush1.xpose.msra.mxu0 0.0
    %694 = vmatprep.subr.mxu0 0.0
    %695 = vmatpush1.xpose.msra.mxu0 0.0
    %696 = vmatprep.subr.mxu0 0.0
    %697 = vmatpush1.xpose.msra.mxu0 0.0
    %698 = vmatprep.subr.mxu0 0.0
    %699 = vmatpush1.xpose.msra.mxu0 0.0
    %700 = vmatprep.subr.mxu0 0.0
    %701 = vmatpush1.xpose.msra.mxu0 0.0
    %702 = vmatprep.subr.mxu0 0.0
    %703 = vmatpush1.xpose.msra.mxu0 0.0
    %704 = vmatprep.subr.mxu0 0.0
    %705 = vmatpush1.xpose.msra.mxu0 0.0
    %706 = vmatprep.subr.mxu0 0.0
    %707 = vmatpush1.xpose.msra.mxu0 0.0
    %708 = vmatprep.subr.mxu0 0.0
    %709 = vmatpush1.xpose.msra.mxu0 0.0
    %710 = vmatprep.subr.mxu0 0.0
    %711 = vmatpush1.xpose.msra.mxu0 0.0
    %712 = vmatprep.subr.mxu0 0.0
    %713 = vmatpush1.xpose.msra.mxu0 0.0
    %714 = vmatprep.subr.mxu0 0.0
    %715 = vmatpush1.xpose.msra.mxu0 0.0
    %716 = vmatprep.mubr.f32.mxu0 0.0
    %717 = vmatmul.mubr.f32.gmra.mrb[0].mxu0 %v644
    %v718 = vpop.f32.mrb[0].mxu0
    %v719 = vadd.f32 0.0, %v718
    %v720 = vpop.f32.mrb[0].mxu0
    %721 = vmatprep.mubr.f32.mxu0 0.0
    %722 = vmatmul.mubr.f32.gmra.mrb[0].mxu0 %v646
    %v723 = vpop.f32.mrb[0].mxu0
    %v724 = vadd.f32 0.0, %v723
    %v725 = vpop.f32.mrb[0].mxu0
    %726 = vdwg.mxu0
    %v727 = vmul.f32 %v719, 0.25
    %v728 = vmul.f32 %v724, 0.25
    %v729 = vadd.f32 %v727, %v237
    %v730 = vadd.f32 %v728, %v238
    %v731 = vsel %vm245, %v729, -inf
    %732 = vmax.xlane.f32.xlu0 %v731
    %v733 = vpop.xlane.xlu0 %732
    %v734 = vsel %vm245, %v730, -inf
    %735 = vmax.xlane.f32.xlu0 %v734
    %v736 = vpop.xlane.xlu0 %735
    %v737 = vsub.f32 %v729, %v733
    %v738 = vsub.f32 %v730, %v736
    %v739 = vmul.f32 %v737, 1.442695
    %v740 = vpow.pop %v739
    %v741 = vmul.f32 %v738, 1.442695
    %v742 = vpow.pop %v741
    %v743 = vsel %vm245, %v740, 0.0
    %744 = vadd.xlane.f32.xlu0 %v743
    %v745 = vpop.xlane.xlu0 %744
    %v746 = vsel %vm245, %v742, 0.0
    %747 = vadd.xlane.f32.xlu0 %v746
    %v748 = vpop.xlane.xlu0 %747
    %v749 = vrcp.pop %v745
    %v750 = vmul.f32 %v740, %v749
    %v751 = vrcp.pop %v748
    %v752 = vmul.f32 %v742, %v751
    %753 = vrot.lane.b32.xlu0 %v195, 16
    %v754 = vpop.permute.xlu0 %753
    %755 = vrot.lane.b32.xlu0 %v201, 16
    %v756 = vpop.permute.xlu0 %755
    %v760 = vsel %vm245, %v750, 0
    %v763 = vsel %vm245, %v752, 0
    %765 = vmatprep.subr.mxu0 0.0
    %766 = vmatpush1.msra.mxu0 %v754
    %767 = vmatprep.subr.mxu0 0.0
    %768 = vmatpush1.msra.mxu0 %v756
    %769 = vmatprep.subr.mxu0 0.0
    %770 = vmatpush1.msra.mxu0 0.0
    %771 = vmatprep.subr.mxu0 0.0
    %772 = vmatpush1.msra.mxu0 0.0
    %773 = vmatprep.subr.mxu0 0.0
    %774 = vmatpush1.msra.mxu0 0.0
    %775 = vmatprep.subr.mxu0 0.0
    %776 = vmatpush1.msra.mxu0 0.0
    %777 = vmatprep.subr.mxu0 0.0
    %778 = vmatpush1.msra.mxu0 0.0
    %779 = vmatprep.subr.mxu0 0.0
    %780 = vmatpush1.msra.mxu0 0.0
    %781 = vmatprep.subr.mxu0 0.0
    %782 = vmatpush1.msra.mxu0 0.0
    %783 = vmatprep.subr.mxu0 0.0
    %784 = vmatpush1.msra.mxu0 0.0
    %785 = vmatprep.subr.mxu0 0.0
    %786 = vmatpush1.msra.mxu0 0.0
    %787 = vmatprep.subr.mxu0 0.0
    %788 = vmatpush1.msra.mxu0 0.0
    %789 = vmatprep.subr.mxu0 0.0
    %790 = vmatpush1.msra.mxu0 0.0
    %791 = vmatprep.subr.mxu0 0.0
    %792 = vmatpush1.msra.mxu0 0.0
    %793 = vmatprep.subr.mxu0 0.0
    %794 = vmatpush1.msra.mxu0 0.0
    %795 = vmatprep.subr.mxu0 0.0
    %796 = vmatpush1.msra.mxu0 0.0
    %797 = vmatprep.subr.mxu0 0.0
    %798 = vmatpush1.msra.mxu0 0.0
    %799 = vmatprep.subr.mxu0 0.0
    %800 = vmatpush1.msra.mxu0 0.0
    %801 = vmatprep.subr.mxu0 0.0
    %802 = vmatpush1.msra.mxu0 0.0
    %803 = vmatprep.subr.mxu0 0.0
    %804 = vmatpush1.msra.mxu0 0.0
    %805 = vmatprep.subr.mxu0 0.0
    %806 = vmatpush1.msra.mxu0 0.0
    %807 = vmatprep.subr.mxu0 0.0
    %808 = vmatpush1.msra.mxu0 0.0
    %809 = vmatprep.subr.mxu0 0.0
    %810 = vmatpush1.msra.mxu0 0.0
    %811 = vmatprep.subr.mxu0 0.0
    %812 = vmatpush1.msra.mxu0 0.0
    %813 = vmatprep.subr.mxu0 0.0
    %814 = vmatpush1.msra.mxu0 0.0
    %815 = vmatprep.subr.mxu0 0.0
    %816 = vmatpush1.msra.mxu0 0.0
    %817 = vmatprep.subr.mxu0 0.0
    %818 = vmatpush1.msra.mxu0 0.0
    %819 = vmatprep.subr.mxu0 0.0
    %820 = vmatpush1.msra.mxu0 0.0
    %821 = vmatprep.subr.mxu0 0.0
    %822 = vmatpush1.msra.mxu0 0.0
    %823 = vmatprep.subr.mxu0 0.0
    %824 = vmatpush1.msra.mxu0 0.0
    %825 = vmatprep.subr.mxu0 0.0
    %826 = vmatpush1.msra.mxu0 0.0
    %827 = vmatprep.subr.mxu0 0.0
    %828 = vmatpush1.msra.mxu0 0.0
    %829 = vmatprep.mubr.f32.mxu0 0.0
    %830 = vmatmul.mubr.f32.gmra.mrb[0].mxu0 %v760
    %v831 = vpop.f32.mrb[0].mxu0
    %v832 = vadd.f32 0.0, %v831
    %v833 = vpop.f32.mrb[0].mxu0
    %834 = vmatprep.mubr.f32.mxu0 0.0
    %835 = vmatmul.mubr.f32.gmra.mrb[0].mxu0 %v763
    %v836 = vpop.f32.mrb[0].mxu0
    %v837 = vadd.f32 0.0, %v836
    %v838 = vpop.f32.mrb[0].mxu0
    %839 = vdwg.mxu0
    %840 = vrot.lane.b32.xlu0 %v213, 80
    %v841 = vpop.permute.xlu0 %840
    %842 = vrot.lane.b32.xlu0 %v214, 80
    %v843 = vpop.permute.xlu0 %842
    %v844 = vsel %vm245, %v841, 0
    %v846 = vsel %vm245, %v843, 0
    %848 = vmatprep.subr.mxu0 0.0
    %849 = vmatpush1.xpose.msra.mxu0 %v648
    %850 = vmatprep.subr.mxu0 0.0
    %851 = vmatpush1.xpose.msra.mxu0 %v650
    %852 = vmatprep.subr.mxu0 0.0
    %853 = vmatpush1.xpose.msra.mxu0 0.0
    %854 = vmatprep.subr.mxu0 0.0
    %855 = vmatpush1.xpose.msra.mxu0 0.0
    %856 = vmatprep.subr.mxu0 0.0
    %857 = vmatpush1.xpose.msra.mxu0 0.0
    %858 = vmatprep.subr.mxu0 0.0
    %859 = vmatpush1.xpose.msra.mxu0 0.0
    %860 = vmatprep.subr.mxu0 0.0
    %861 = vmatpush1.xpose.msra.mxu0 0.0
    %862 = vmatprep.subr.mxu0 0.0
    %863 = vmatpush1.xpose.msra.mxu0 0.0
    %864 = vmatprep.subr.mxu0 0.0
    %865 = vmatpush1.xpose.msra.mxu0 0.0
    %866 = vmatprep.subr.mxu0 0.0
    %867 = vmatpush1.xpose.msra.mxu0 0.0
    %868 = vmatprep.subr.mxu0 0.0
    %869 = vmatpush1.xpose.msra.mxu0 0.0
    %870 = vmatprep.subr.mxu0 0.0
    %871 = vmatpush1.xpose.msra.mxu0 0.0
    %872 = vmatprep.subr.mxu0 0.0
    %873 = vmatpush1.xpose.msra.mxu0 0.0
    %874 = vmatprep.subr.mxu0 0.0
    %875 = vmatpush1.xpose.msra.mxu0 0.0
    %876 = vmatprep.subr.mxu0 0.0
    %877 = vmatpush1.xpose.msra.mxu0 0.0
    %878 = vmatprep.subr.mxu0 0.0
    %879 = vmatpush1.xpose.msra.mxu0 0.0
    %880 = vmatprep.subr.mxu0 0.0
    %881 = vmatpush1.xpose.msra.mxu0 0.0
    %882 = vmatprep.subr.mxu0 0.0
    %883 = vmatpush1.xpose.msra.mxu0 0.0
    %884 = vmatprep.subr.mxu0 0.0
    %885 = vmatpush1.xpose.msra.mxu0 0.0
    %886 = vmatprep.subr.mxu0 0.0
    %887 = vmatpush1.xpose.msra.mxu0 0.0
    %888 = vmatprep.subr.mxu0 0.0
    %889 = vmatpush1.xpose.msra.mxu0 0.0
    %890 = vmatprep.subr.mxu0 0.0
    %891 = vmatpush1.xpose.msra.mxu0 0.0
    %892 = vmatprep.subr.mxu0 0.0
    %893 = vmatpush1.xpose.msra.mxu0 0.0
    %894 = vmatprep.subr.mxu0 0.0
    %895 = vmatpush1.xpose.msra.mxu0 0.0
    %896 = vmatprep.subr.mxu0 0.0
    %897 = vmatpush1.xpose.msra.mxu0 0.0
    %898 = vmatprep.subr.mxu0 0.0
    %899 = vmatpush1.xpose.msra.mxu0 0.0
    %900 = vmatprep.subr.mxu0 0.0
    %901 = vmatpush1.xpose.msra.mxu0 0.0
    %902 = vmatprep.subr.mxu0 0.0
    %903 = vmatpush1.xpose.msra.mxu0 0.0
    %904 = vmatprep.subr.mxu0 0.0
    %905 = vmatpush1.xpose.msra.mxu0 0.0
    %906 = vmatprep.subr.mxu0 0.0
    %907 = vmatpush1.xpose.msra.mxu0 0.0
    %908 = vmatprep.subr.mxu0 0.0
    %909 = vmatpush1.xpose.msra.mxu0 0.0
    %910 = vmatprep.subr.mxu0 0.0
    %911 = vmatpush1.xpose.msra.mxu0 0.0
    %912 = vmatprep.mubr.f32.mxu0 0.0
    %913 = vmatmul.mubr.f32.gmra.mrb[0].mxu0 %v844
    %v914 = vpop.f32.mrb[0].mxu0
    %v915 = vadd.f32 0.0, %v914
    %v916 = vpop.f32.mrb[0].mxu0
    %917 = vmatprep.mubr.f32.mxu0 0.0
    %918 = vmatmul.mubr.f32.gmra.mrb[0].mxu0 %v846
    %v919 = vpop.f32.mrb[0].mxu0
    %v920 = vadd.f32 0.0, %v919
    %v921 = vpop.f32.mrb[0].mxu0
    %922 = vdwg.mxu0
    %v923 = vmul.f32 %v915, 0.25
    %v924 = vmul.f32 %v920, 0.25
    %v925 = vadd.f32 %v923, %v237
    %v926 = vadd.f32 %v924, %v238
    %v927 = vsel %vm245, %v925, -inf
    %928 = vmax.xlane.f32.xlu0 %v927
    %v929 = vpop.xlane.xlu0 %928
    %v930 = vsel %vm245, %v926, -inf
    %931 = vmax.xlane.f32.xlu0 %v930
    %v932 = vpop.xlane.xlu0 %931
    %v933 = vsub.f32 %v925, %v929
    %v934 = vsub.f32 %v926, %v932
    %v935 = vmul.f32 %v933, 1.442695
    %v936 = vpow.pop %v935
    %v937 = vmul.f32 %v934, 1.442695
    %v938 = vpow.pop %v937
    %v939 = vsel %vm245, %v936, 0.0
    %940 = vadd.xlane.f32.xlu0 %v939
    %v941 = vpop.xlane.xlu0 %940
    %v942 = vsel %vm245, %v938, 0.0
    %943 = vadd.xlane.f32.xlu0 %v942
    %v944 = vpop.xlane.xlu0 %943
    %v945 = vrcp.pop %v941
    %v946 = vmul.f32 %v936, %v945
    %v947 = vrcp.pop %v944
    %v948 = vmul.f32 %v938, %v947
    %v950 = vsel %vm245, %v946, 0
    %v953 = vsel %vm245, %v948, 0
    %955 = vmatprep.subr.mxu0 0.0
    %956 = vmatpush1.msra.mxu0 %v754
    %957 = vmatprep.subr.mxu0 0.0
    %958 = vmatpush1.msra.mxu0 %v756
    %959 = vmatprep.subr.mxu0 0.0
    %960 = vmatpush1.msra.mxu0 0.0
    %961 = vmatprep.subr.mxu0 0.0
    %962 = vmatpush1.msra.mxu0 0.0
    %963 = vmatprep.subr.mxu0 0.0
    %964 = vmatpush1.msra.mxu0 0.0
    %965 = vmatprep.subr.mxu0 0.0
    %966 = vmatpush1.msra.mxu0 0.0
    %967 = vmatprep.subr.mxu0 0.0
    %968 = vmatpush1.msra.mxu0 0.0
    %969 = vmatprep.subr.mxu0 0.0
    %970 = vmatpush1.msra.mxu0 0.0
    %971 = vmatprep.subr.mxu0 0.0
    %972 = vmatpush1.msra.mxu0 0.0
    %973 = vmatprep.subr.mxu0 0.0
    %974 = vmatpush1.msra.mxu0 0.0
    %975 = vmatprep.subr.mxu0 0.0
    %976 = vmatpush1.msra.mxu0 0.0
    %977 = vmatprep.subr.mxu0 0.0
    %978 = vmatpush1.msra.mxu0 0.0
    %979 = vmatprep.subr.mxu0 0.0
    %980 = vmatpush1.msra.mxu0 0.0
    %981 = vmatprep.subr.mxu0 0.0
    %982 = vmatpush1.msra.mxu0 0.0
    %983 = vmatprep.subr.mxu0 0.0
    %984 = vmatpush1.msra.mxu0 0.0
    %985 = vmatprep.subr.mxu0 0.0
    %986 = vmatpush1.msra.mxu0 0.0
    %987 = vmatprep.subr.mxu0 0.0
    %988 = vmatpush1.msra.mxu0 0.0
    %989 = vmatprep.subr.mxu0 0.0
    %990 = vmatpush1.msra.mxu0 0.0
    %991 = vmatprep.subr.mxu0 0.0
    %992 = vmatpush1.msra.mxu0 0.0
    %993 = vmatprep.subr.mxu0 0.0
    %994 = vmatpush1.msra.mxu0 0.0
    %995 = vmatprep.subr.mxu0 0.0
    %996 = vmatpush1.msra.mxu0 0.0
    %997 = vmatprep.subr.mxu0 0.0
    %998 = vmatpush1.msra.mxu0 0.0
    %999 = vmatprep.subr.mxu0 0.0
    %1000 = vmatpush1.msra.mxu0 0.0
    %1001 = vmatprep.subr.mxu0 0.0
    %1002 = vmatpush1.msra.mxu0 0.0
    %1003 = vmatprep.subr.mxu0 0.0
    %1004 = vmatpush1.msra.mxu0 0.0
    %1005 = vmatprep.subr.mxu0 0.0
    %1006 = vmatpush1.msra.mxu0 0.0
    %1007 = vmatprep.subr.mxu0 0.0
    %1008 = vmatpush1.msra.mxu0 0.0
    %1009 = vmatprep.subr.mxu0 0.0
    %1010 = vmatpush1.msra.mxu0 0.0
    %1011 = vmatprep.subr.mxu0 0.0
    %1012 = vmatpush1.msra.mxu0 0.0
    %1013 = vmatprep.subr.mxu0 0.0
    %1014 = vmatpush1.msra.mxu0 0.0
    %1015 = vmatprep.subr.mxu0 0.0
    %1016 = vmatpush1.msra.mxu0 0.0
    %1017 = vmatprep.subr.mxu0 0.0
    %1018 = vmatpush1.msra.mxu0 0.0
    %1019 = vmatprep.mubr.f32.mxu0 0.0
    %1020 = vmatmul.mubr.f32.gmra.mrb[0].mxu0 %v950
    %v1021 = vpop.f32.mrb[0].mxu0
    %v1022 = vadd.f32 0.0, %v1021
    %v1023 = vpop.f32.mrb[0].mxu0
    %1024 = vmatprep.mubr.f32.mxu0 0.0
    %1025 = vmatmul.mubr.f32.gmra.mrb[0].mxu0 %v953
    %v1026 = vpop.f32.mrb[0].mxu0
    %v1027 = vadd.f32 0.0, %v1026
    %v1028 = vpop.f32.mrb[0].mxu0
    %1029 = vdwg.mxu0
    %1032 = vrot.lane.b32.xlu0 %v628, 16
    %v1033 = vpop.permute.xlu0 %1032
    %1034 = vrot.lane.b32.xlu0 %v633, 16
    %v1035 = vpop.permute.xlu0 %1034
    %1040 = vrot.lane.b32.xlu0 %v832, 32
    %v1041 = vpop.permute.xlu0 %1040
    %1042 = vrot.lane.b32.xlu0 %v837, 32
    %v1043 = vpop.permute.xlu0 %1042
    %1048 = vrot.lane.b32.xlu0 %v1022, 48
    %v1049 = vpop.permute.xlu0 %1048
    %1050 = vrot.lane.b32.xlu0 %v1027, 48
    %v1051 = vpop.permute.xlu0 %1050
    %v1054 = vsel %vm245, %v438, %v1033
    %v1055 = vsel %vm245, %v443, %v1035
    %vm1056 = vcmask 261120
    %v1057 = vsel %vm1056, %v1054, %v1041
    %v1058 = vsel %vm1056, %v1055, %v1043
    %vm1059 = vcmask 392192
    %v1060 = vsel %vm1059, %v1057, %v1049
    %v1061 = vsel %vm1059, %v1058, %v1051
    %v1062 = vld [vmem:[%s4] sm:$0xff]
    %v1063 = vld [vmem:[%s4 + $0x8] sm:$0xff]
    %v1064 = vld [vmem:[%s4 + $0x10] sm:$0xff]
    %v1065 = vld [vmem:[%s4 + $0x18] sm:$0xff]
    %v1066 = vld [vmem:[%s4 + $0x20] sm:$0xff]
    %v1067 = vld [vmem:[%s4 + $0x28] sm:$0xff]
    %v1068 = vld [vmem:[%s4 + $0x30] sm:$0xff]
    %v1069 = vld [vmem:[%s4 + $0x38] sm:$0xff]
    %v1071 = vsel %vm82, %v1060, 0
    %v1074 = vsel %vm82, %v1061, 0
    %1076 = vmatprep.subr.mxu0 0.0
    %1077 = vmatpush1.msra.mxu0 %v1062
    %1078 = vmatprep.subr.mxu0 0.0
    %1079 = vmatpush1.msra.mxu0 %v1063
    %1080 = vmatprep.subr.mxu0 0.0
    %1081 = vmatpush1.msra.mxu0 %v1064
    %1082 = vmatprep.subr.mxu0 0.0
    %1083 = vmatpush1.msra.mxu0 %v1065
    %1084 = vmatprep.subr.mxu0 0.0
    %1085 = vmatpush1.msra.mxu0 %v1066
    %1086 = vmatprep.subr.mxu0 0.0
    %1087 = vmatpush1.msra.mxu0 %v1067
    %1088 = vmatprep.subr.mxu0 0.0
    %1089 = vmatpush1.msra.mxu0 %v1068
    %1090 = vmatprep.subr.mxu0 0.0
    %1091 = vmatpush1.msra.mxu0 %v1069
    %1092 = vmatprep.subr.mxu0 0.0
    %1093 = vmatpush1.msra.mxu0 0.0
    %1094 = vmatprep.subr.mxu0 0.0
    %1095 = vmatpush1.msra.mxu0 0.0
    %1096 = vmatprep.subr.mxu0 0.0
    %1097 = vmatpush1.msra.mxu0 0.0
    %1098 = vmatprep.subr.mxu0 0.0
    %1099 = vmatpush1.msra.mxu0 0.0
    %1100 = vmatprep.subr.mxu0 0.0
    %1101 = vmatpush1.msra.mxu0 0.0
    %1102 = vmatprep.subr.mxu0 0.0
    %1103 = vmatpush1.msra.mxu0 0.0
    %1104 = vmatprep.subr.mxu0 0.0
    %1105 = vmatpush1.msra.mxu0 0.0
    %1106 = vmatprep.subr.mxu0 0.0
    %1107 = vmatpush1.msra.mxu0 0.0
    %1108 = vmatprep.subr.mxu0 0.0
    %1109 = vmatpush1.msra.mxu0 0.0
    %1110 = vmatprep.subr.mxu0 0.0
    %1111 = vmatpush1.msra.mxu0 0.0
    %1112 = vmatprep.subr.mxu0 0.0
    %1113 = vmatpush1.msra.mxu0 0.0
    %1114 = vmatprep.subr.mxu0 0.0
    %1115 = vmatpush1.msra.mxu0 0.0
    %1116 = vmatprep.subr.mxu0 0.0
    %1117 = vmatpush1.msra.mxu0 0.0
    %1118 = vmatprep.subr.mxu0 0.0
    %1119 = vmatpush1.msra.mxu0 0.0
    %1120 = vmatprep.subr.mxu0 0.0
    %1121 = vmatpush1.msra.mxu0 0.0
    %1122 = vmatprep.subr.mxu0 0.0
    %1123 = vmatpush1.msra.mxu0 0.0
    %1124 = vmatprep.subr.mxu0 0.0
    %1125 = vmatpush1.msra.mxu0 0.0
    %1126 = vmatprep.subr.mxu0 0.0
    %1127 = vmatpush1.msra.mxu0 0.0
    %1128 = vmatprep.subr.mxu0 0.0
    %1129 = vmatpush1.msra.mxu0 0.0
    %1130 = vmatprep.subr.mxu0 0.0
    %1131 = vmatpush1.msra.mxu0 0.0
    %1132 = vmatprep.subr.mxu0 0.0
    %1133 = vmatpush1.msra.mxu0 0.0
    %1134 = vmatprep.subr.mxu0 0.0
    %1135 = vmatpush1.msra.mxu0 0.0
    %1136 = vmatprep.subr.mxu0 0.0
    %1137 = vmatpush1.msra.mxu0 0.0
    %1138 = vmatprep.subr.mxu0 0.0
    %1139 = vmatpush1.msra.mxu0 0.0
    %1140 = vmatprep.mubr.f32.mxu0 0.0
    %1141 = vmatmul.mubr.f32.gmra.mrb[0].mxu0 %v1071
    %v1142 = vpop.f32.mrb[0].mxu0
    %v1143 = vadd.f32 0.0, %v1142
    %v1144 = vpop.f32.mrb[0].mxu0
    %1145 = vmatprep.mubr.f32.mxu0 0.0
    %1146 = vmatmul.mubr.f32.gmra.mrb[0].mxu0 %v1074
    %v1147 = vpop.f32.mrb[0].mxu0
    %v1148 = vadd.f32 0.0, %v1147
    %v1149 = vpop.f32.mrb[0].mxu0
    %1150 = vdwg.mxu0
    %v1151 = vadd.f32 %v77, %v1143
    %v1152 = vadd.f32 %v78, %v1148
    %v1153 = vld [vmem:[%s2] sm:$0x1]
    %v1154 = vmul.f32 %v1151, %v1151
    %v1155 = vmul.f32 %v1152, %v1152
    %v1156 = vsel %vm82, %v1154, 0.0
    %1157 = vadd.xlane.f32.xlu0 %v1156
    %v1158 = vpop.xlane.xlu0 %1157
    %v1159 = vsel %vm82, %v1155, 0.0
    %1160 = vadd.xlane.f32.xlu0 %v1159
    %v1161 = vpop.xlane.xlu0 %1160
    %v1162 = vmul.f32 %v1158, %v89
    %v1163 = vmul.f32 %v1161, %v89
    %v1164 = vadd.f32 %v1162, 1e-05
    %v1165 = vadd.f32 %v1163, 1e-05
    %v1166 = vrsqrt.pop %v1164
    %v1167 = vrsqrt.pop %v1165
    %v1168 = vmul.f32 %v1151, %v1166
    %v1169 = vmul.f32 %v1152, %v1167
    %v1171 = vlaneseq
    %v1172 = vshrl.u32 %v1171, 7
    %v1173 = vsub.s32 0, %v1172
    %v1174 = vrot.slane %v1153, %v1173
    %v1176 = vmul.f32 %v1168, %v1174
    %v1177 = vmul.f32 %v1169, %v1174
    %v1178 = vld [vmem:[#allocation5] sm:$0xff]
    %v1179 = vld [vmem:[#allocation5 + $0x8] sm:$0xff]
    %v1180 = vld [vmem:[#allocation5 + $0x10] sm:$0xff]
    %v1181 = vld [vmem:[#allocation5 + $0x18] sm:$0xff]
    %v1182 = vld [vmem:[#allocation5 + $0x20] sm:$0xff]
    %v1183 = vld [vmem:[#allocation5 + $0x28] sm:$0xff]
    %v1184 = vld [vmem:[#allocation5 + $0x30] sm:$0xff]
    %v1185 = vld [vmem:[#allocation5 + $0x38] sm:$0xff]
    %v1186 = vld [vmem:[#allocation5 + $0x40] sm:$0xff]
    %v1187 = vld [vmem:[#allocation5 + $0x48] sm:$0xff]
    %v1188 = vld [vmem:[#allocation5 + $0x50] sm:$0xff]
    %v1189 = vld [vmem:[#allocation5 + $0x58] sm:$0xff]
    %v1190 = vld [vmem:[#allocation5 + $0x60] sm:$0xff]
    %v1191 = vld [vmem:[#allocation5 + $0x68] sm:$0xff]
    %v1192 = vld [vmem:[#allocation5 + $0x70] sm:$0xff]
    %v1193 = vld [vmem:[#allocation5 + $0x78] sm:$0xff]
    %v1195 = vsel %vm82, %v1176, 0
    %v1198 = vsel %vm82, %v1177, 0
    %1200 = vmatprep.subr.mxu0 %v1179
    %1201 = vmatpush1.msra.mxu0 %v1178
    %1202 = vmatprep.subr.mxu0 %v1181
    %1203 = vmatpush1.msra.mxu0 %v1180
    %1204 = vmatprep.subr.mxu0 %v1183
    %1205 = vmatpush1.msra.mxu0 %v1182
    %1206 = vmatprep.subr.mxu0 %v1185
    %1207 = vmatpush1.msra.mxu0 %v1184
    %1208 = vmatprep.subr.mxu0 %v1187
    %1209 = vmatpush1.msra.mxu0 %v1186
    %1210 = vmatprep.subr.mxu0 %v1189
    %1211 = vmatpush1.msra.mxu0 %v1188
    %1212 = vmatprep.subr.mxu0 %v1191
    %1213 = vmatpush1.msra.mxu0 %v1190
    %1214 = vmatprep.subr.mxu0 %v1193
    %1215 = vmatpush1.msra.mxu0 %v1192
    %1216 = vmatprep.subr.mxu0 0.0
    %1217 = vmatpush1.msra.mxu0 0.0
    %1218 = vmatprep.subr.mxu0 0.0
    %1219 = vmatpush1.msra.mxu0 0.0
    %1220 = vmatprep.subr.mxu0 0.0
    %1221 = vmatpush1.msra.mxu0 0.0
    %1222 = vmatprep.subr.mxu0 0.0
    %1223 = vmatpush1.msra.mxu0 0.0
    %1224 = vmatprep.subr.mxu0 0.0
    %1225 = vmatpush1.msra.mxu0 0.0
    %1226 = vmatprep.subr.mxu0 0.0
    %1227 = vmatpush1.msra.mxu0 0.0
    %1228 = vmatprep.subr.mxu0 0.0
    %1229 = vmatpush1.msra.mxu0 0.0
    %1230 = vmatprep.subr.mxu0 0.0
    %1231 = vmatpush1.msra.mxu0 0.0
    %1232 = vmatprep.subr.mxu0 0.0
    %1233 = vmatpush1.msra.mxu0 0.0
    %1234 = vmatprep.subr.mxu0 0.0
    %1235 = vmatpush1.msra.mxu0 0.0
    %1236 = vmatprep.subr.mxu0 0.0
    %1237 = vmatpush1.msra.mxu0 0.0
    %1238 = vmatprep.subr.mxu0 0.0
    %1239 = vmatpush1.msra.mxu0 0.0
    %1240 = vmatprep.subr.mxu0 0.0
    %1241 = vmatpush1.msra.mxu0 0.0
    %1242 = vmatprep.subr.mxu0 0.0
    %1243 = vmatpush1.msra.mxu0 0.0
    %1244 = vmatprep.subr.mxu0 0.0
    %1245 = vmatpush1.msra.mxu0 0.0
    %1246 = vmatprep.subr.mxu0 0.0
    %1247 = vmatpush1.msra.mxu0 0.0
    %1248 = vmatprep.subr.mxu0 0.0
    %1249 = vmatpush1.msra.mxu0 0.0
    %1250 = vmatprep.subr.mxu0 0.0
    %1251 = vmatpush1.msra.mxu0 0.0
    %1252 = vmatprep.subr.mxu0 0.0
    %1253 = vmatpush1.msra.mxu0 0.0
    %1254 = vmatprep.subr.mxu0 0.0
    %1255 = vmatpush1.msra.mxu0 0.0
    %1256 = vmatprep.subr.mxu0 0.0
    %1257 = vmatpush1.msra.mxu0 0.0
    %1258 = vmatprep.subr.mxu0 0.0
    %1259 = vmatpush1.msra.mxu0 0.0
    %1260 = vmatprep.subr.mxu0 0.0
    %1261 = vmatpush1.msra.mxu0 0.0
    %1262 = vmatprep.subr.mxu0 0.0
    %1263 = vmatpush1.msra.mxu0 0.0
    %1264 = vmatprep.mubr.f32.mxu0 0.0
    %1265 = vmatmul.mubr.f32.gmra.mrb[0].mxu0 %v1195
    %v1266 = vpop.f32.mrb[0].mxu0
    %v1267 = vadd.f32 0.0, %v1266
    %v1268 = vpop.f32.mrb[0].mxu0
    %v1269 = vadd.f32 0.0, %v1268
    %1270 = vmatprep.mubr.f32.mxu0 0.0
    %1271 = vmatmul.mubr.f32.gmra.mrb[0].mxu0 %v1198
    %v1272 = vpop.f32.mrb[0].mxu0
    %v1273 = vadd.f32 0.0, %v1272
    %v1274 = vpop.f32.mrb[0].mxu0
    %v1275 = vadd.f32 0.0, %v1274
    %1276 = vdwg.mxu0
    %v1277 = vxor.u32 %v1267, 2147483648
    %v1278 = vxor.u32 %v1273, 2147483648
    %v1279 = vmul.f32 %v1277, 1.442695
    %v1280 = vpow.pop %v1279
    %v1281 = vmul.f32 %v1278, 1.442695
    %v1282 = vpow.pop %v1281
    %v1283 = vadd.f32 %v1280, 1.0
    %v1284 = vadd.f32 %v1282, 1.0
    %v1285 = vrcp.pop %v1283
    %v1286 = vmul.f32 1.0, %v1285
    %v1287 = vrcp.pop %v1284
    %v1288 = vmul.f32 1.0, %v1287
    %v1289 = vmul.f32 %v1267, %v1286
    %v1290 = vmul.f32 %v1273, %v1288
    %v1291 = vmul.f32 %v1289, %v1269
    %v1292 = vmul.f32 %v1290, %v1275
    %v1293 = vld [vmem:[%s6] sm:$0xff]
    %v1294 = vld [vmem:[%s6 + $0x8] sm:$0xff]
    %v1295 = vld [vmem:[%s6 + $0x10] sm:$0xff]
    %v1296 = vld [vmem:[%s6 + $0x18] sm:$0xff]
    %v1297 = vld [vmem:[%s6 + $0x20] sm:$0xff]
    %v1298 = vld [vmem:[%s6 + $0x28] sm:$0xff]
    %v1299 = vld [vmem:[%s6 + $0x30] sm:$0xff]
    %v1300 = vld [vmem:[%s6 + $0x38] sm:$0xff]
    %v1301 = vld [vmem:[%s6 + $0x40] sm:$0xff]
    %v1302 = vld [vmem:[%s6 + $0x48] sm:$0xff]
    %v1303 = vld [vmem:[%s6 + $0x50] sm:$0xff]
    %v1304 = vld [vmem:[%s6 + $0x58] sm:$0xff]
    %v1305 = vld [vmem:[%s6 + $0x60] sm:$0xff]
    %v1306 = vld [vmem:[%s6 + $0x68] sm:$0xff]
    %v1307 = vld [vmem:[%s6 + $0x70] sm:$0xff]
    %v1308 = vld [vmem:[%s6 + $0x78] sm:$0xff]
    %1309 = vmatprep.subr.mxu0 0.0
    %1310 = vmatpush1.msra.mxu0 %v1293
    %1311 = vmatprep.subr.mxu0 0.0
    %1312 = vmatpush1.msra.mxu0 %v1294
    %1313 = vmatprep.subr.mxu0 0.0
    %1314 = vmatpush1.msra.mxu0 %v1295
    %1315 = vmatprep.subr.mxu0 0.0
    %1316 = vmatpush1.msra.mxu0 %v1296
    %1317 = vmatprep.subr.mxu0 0.0
    %1318 = vmatpush1.msra.mxu0 %v1297
    %1319 = vmatprep.subr.mxu0 0.0
    %1320 = vmatpush1.msra.mxu0 %v1298
    %1321 = vmatprep.subr.mxu0 0.0
    %1322 = vmatpush1.msra.mxu0 %v1299
    %1323 = vmatprep.subr.mxu0 0.0
    %1324 = vmatpush1.msra.mxu0 %v1300
    %1325 = vmatprep.subr.mxu0 0.0
    %1326 = vmatpush1.msra.mxu0 %v1301
    %1327 = vmatprep.subr.mxu0 0.0
    %1328 = vmatpush1.msra.mxu0 %v1302
    %1329 = vmatprep.subr.mxu0 0.0
    %1330 = vmatpush1.msra.mxu0 %v1303
    %1331 = vmatprep.subr.mxu0 0.0
    %1332 = vmatpush1.msra.mxu0 %v1304
    %1333 = vmatprep.subr.mxu0 0.0
    %1334 = vmatpush1.msra.mxu0 %v1305
    %1335 = vmatprep.subr.mxu0 0.0
    %1336 = vmatpush1.msra.mxu0 %v1306
    %1337 = vmatprep.subr.mxu0 0.0
    %1338 = vmatpush1.msra.mxu0 %v1307
    %1339 = vmatprep.subr.mxu0 0.0
    %1340 = vmatpush1.msra.mxu0 %v1308
    %1341 = vmatprep.subr.mxu0 0.0
    %1342 = vmatpush1.msra.mxu0 0.0
    %1343 = vmatprep.subr.mxu0 0.0
    %1344 = vmatpush1.msra.mxu0 0.0
    %1345 = vmatprep.subr.mxu0 0.0
    %1346 = vmatpush1.msra.mxu0 0.0
    %1347 = vmatprep.subr.mxu0 0.0
    %1348 = vmatpush1.msra.mxu0 0.0
    %1349 = vmatprep.subr.mxu0 0.0
    %1350 = vmatpush1.msra.mxu0 0.0
    %1351 = vmatprep.subr.mxu0 0.0
    %1352 = vmatpush1.msra.mxu0 0.0
    %1353 = vmatprep.subr.mxu0 0.0
    %1354 = vmatpush1.msra.mxu0 0.0
    %1355 = vmatprep.subr.mxu0 0.0
    %1356 = vmatpush1.msra.mxu0 0.0
    %1357 = vmatprep.subr.mxu0 0.0
    %1358 = vmatpush1.msra.mxu0 0.0
    %1359 = vmatprep.subr.mxu0 0.0
    %1360 = vmatpush1.msra.mxu0 0.0
    %1361 = vmatprep.subr.mxu0 0.0
    %1362 = vmatpush1.msra.mxu0 0.0
    %1363 = vmatprep.subr.mxu0 0.0
    %1364 = vmatpush1.msra.mxu0 0.0
    %1365 = vmatprep.subr.mxu0 0.0
    %1366 = vmatpush1.msra.mxu0 0.0
    %1367 = vmatprep.subr.mxu0 0.0
    %1368 = vmatpush1.msra.mxu0 0.0
    %1369 = vmatprep.subr.mxu0 0.0
    %1370 = vmatpush1.msra.mxu0 0.0
    %1371 = vmatprep.subr.mxu0 0.0
    %1372 = vmatpush1.msra.mxu0 0.0
    %1373 = vmatprep.mubr.f32.mxu0 0.0
    %1374 = vmatmul.mubr.f32.gmra.mrb[0].mxu0 %v1291
    %v1375 = vpop.f32.mrb[0].mxu0
    %v1376 = vadd.f32 0.0, %v1375
    %v1377 = vpop.f32.mrb[0].mxu0
    %1378 = vmatprep.mubr.f32.mxu0 0.0
    %1379 = vmatmul.mubr.f32.gmra.mrb[0].mxu0 %v1292
    %v1380 = vpop.f32.mrb[0].mxu0
    %v1381 = vadd.f32 0.0, %v1380
    %v1382 = vpop.f32.mrb[0].mxu0
    %1383 = vdwg.mxu0
    %v1384 = vadd.f32 %v1151, %v1376
    %v1385 = vadd.f32 %v1152, %v1381
    %1386 = vst.msk [vmem:[#allocation8] sm:$0xff] %vm82, %v1384
    %1387 = vst.msk [vmem:[#allocation8 + $0x8] sm:$0xff] %vm82, %v1385
    // Predicated region
    $region54: #{tpu_custom_call.1} parent=1 // pred_check
      _
    $region55: #{tpu_custom_call.1} parent=1 // pred_check_branch
      %1389 = sbr.rel (0) target = $region57
    $region56: #{tpu_custom_call.1} parent=1 // pred_region
      %s1391 = ssub.s32 256, 256
      %1392 = vsyncadd [#allocation4], %s1391
      %s1393 = sshll.u32 [#allocation8], 4
      %s1394 = int_to_ptr.vmem [resolvable:$true] %s1393
      %1399 = dma.vmem_to_hbm [thread:$0]  %s1394, 256, %s10, [#allocation4], 128, 128, 8
    $region57: #{tpu_custom_call.1} parent=1 // pred_fallthru
      _
    // Predicated region
    $region58: #{tpu_custom_call.1} parent=1 // pred_check
      _
    $region59: #{tpu_custom_call.1} parent=1 // pred_check_branch
      %1401 = sbr.rel (0) target = $region61
    $region60: #{tpu_custom_call.1} parent=1 // pred_region
      %1402 = dma.done [#allocation4], 256
    $region61: #{tpu_custom_call.1} parent=1 // pred_fallthru
      _
    %1403 = vsyncpa [#allocation3], 1
    %1404 = vsyncpa [#allocation6], 1
    %1405 = vsyncpa [#allocation4], 1

</llo_original>
